<compile_context>
chip_gen: v7x
topology: tpu7x:2x2x1
jax: 0.10.0
libtpu: 0.0.40
codegen_flags: <defaults>
</compile_context>

<pallas_src>
import functools
import math

import jax
import jax.numpy as jnp
from jax import lax
from jax.experimental import pallas as pl
from jax.experimental.pallas import tpu as pltpu


def _round_up(x, m):
    return (x + m - 1) // m * m


def _gelu(h, approximate):
    if approximate:
        # tanh approximation -> EUP slot (overlaps with MXU work for free)
        c = math.sqrt(2.0 / math.pi)
        return 0.5 * h * (1.0 + jnp.tanh(c * (h + 0.044715 * h * h * h)))
    # exact GELU: matches PyTorch nn.GELU() default
    return 0.5 * h * (1.0 + lax.erf(h * (1.0 / math.sqrt(2.0))))


# --------------------------- kernels ----------------------------------------

def _mlp_kernel_resident(x_ref, w1_ref, b1_ref, w2_ref, b2_ref, o_ref, *,
                         approximate_gelu):
    # fc1: (tm, C_in) @ (C_in, H), accumulate in f32 on the MXU
    h = jnp.dot(x_ref[...], w1_ref[...], preferred_element_type=jnp.float32)
    h = _gelu(h + b1_ref[...], approximate_gelu)
    # fc2: (tm, H) @ (H, C_out)
    o = jnp.dot(h.astype(w2_ref.dtype), w2_ref[...],
                preferred_element_type=jnp.float32)
    o_ref[...] = (o + b2_ref[...]).astype(o_ref.dtype)


def _mlp_kernel_htiled(x_ref, w1_ref, b1_ref, w2_ref, b2_ref, o_ref, acc_ref, *,
                       approximate_gelu):
    # Grid = (row tiles, hidden tiles); hidden axis is a reduction for fc2.
    k = pl.program_id(1)

    @pl.when(k == 0)
    def _():
        acc_ref[...] = jnp.zeros_like(acc_ref)

    h = jnp.dot(x_ref[...], w1_ref[...], preferred_element_type=jnp.float32)
    h = _gelu(h + b1_ref[...], approximate_gelu)
    acc_ref[...] += jnp.dot(h.astype(w2_ref.dtype), w2_ref[...],
                            preferred_element_type=jnp.float32)

    @pl.when(k == pl.num_programs(1) - 1)
    def _():
        o_ref[...] = (acc_ref[...] + b2_ref[...]).astype(o_ref.dtype)


# --------------------------- wrapper -----------------------------------------

def mlp_forward(x, w1, b1, w2, b2, *, tm=256, th=None, compute_dtype=None,
                approximate_gelu=False):
    """x: (..., C_in) -> (..., C_out), y = fc2(GELU(fc1(x))).

    tm: row tile (tokens per grid step); rows are zero-padded if M % tm != 0.
    th: optional hidden tile. None -> weights fully resident (v5e/v6e style);
        set (e.g. 512) to bound weight residency per step (v7x / huge hidden).
    compute_dtype: dtype fed to the MXU (e.g. jnp.bfloat16); accumulation and
        bias adds stay f32; output keeps x.dtype.
    """
    orig_shape = x.shape
    C_in = orig_shape[-1]
    hidden = w1.shape[1]
    C_out = w2.shape[1]
    assert w1.shape[0] == C_in and w2.shape[0] == hidden
    out_dtype = x.dtype
    compute_dtype = compute_dtype or x.dtype
    itemsize = jnp.dtype(compute_dtype).itemsize

    M = math.prod(orig_shape[:-1])
    x2d = x.reshape(M, C_in)

    # Row tile: as large as requested, but never larger than the (8-aligned)
    # row count; pad rows with zeros so the grid divides evenly.
    tm = max(8, min(tm, _round_up(M, 8)))
    Mp = _round_up(M, tm)
    if Mp != M:
        x2d = jnp.pad(x2d, ((0, Mp - M), (0, 0)))

    # Cast MXU operands; biases stay f32 (added onto the f32 accumulator).
    xc = x2d.astype(compute_dtype)
    w1c = w1.astype(compute_dtype)
    w2c = w2.astype(compute_dtype)
    b1_2d = b1.reshape(1, hidden).astype(jnp.float32)
    b2_2d = b2.reshape(1, C_out).astype(jnp.float32)

    weight_bytes = (C_in * hidden + hidden * C_out) * itemsize
    # Auto-enable hidden tiling when resident weights would not comfortably fit
    # the scoped VMEM budget (v7x has only 64 MiB physical VMEM).
    if th is None and weight_bytes > (24 << 20):
        th = 512
    if th is not None:
        th = max(128, _round_up(min(th, hidden), 128))

    cost = pl.CostEstimate(
        flops=2 * Mp * (C_in * hidden + hidden * C_out),
        transcendentals=Mp * hidden,
        bytes_accessed=(Mp * (C_in + C_out) * itemsize + weight_bytes
                        + (hidden + C_out) * 4),
    )

    def _run(const_pipeline_mode):
        def const_spec(shape, index_map):
            # grid-invariant operand: single-buffer it if supported
            if const_pipeline_mode is not None:
                return pl.BlockSpec(shape, index_map,
                                    pipeline_mode=const_pipeline_mode)
            return pl.BlockSpec(shape, index_map)

        if th is None:
            # ---- weights fully resident; stream row tiles ----
            kernel = functools.partial(_mlp_kernel_resident,
                                       approximate_gelu=approximate_gelu)
            grid = (Mp // tm,)
            in_specs = [
                pl.BlockSpec((tm, C_in), lambda i: (i, 0)),
                const_spec((C_in, hidden), lambda i: (0, 0)),
                const_spec((1, hidden), lambda i: (0, 0)),
                const_spec((hidden, C_out), lambda i: (0, 0)),
                const_spec((1, C_out), lambda i: (0, 0)),
            ]
            out_specs = pl.BlockSpec((tm, C_out), lambda i: (i, 0))
            scratch_shapes = []
            dims = ("parallel",)
            operands = (xc, w1c, b1_2d, w2c, b2_2d)
            vmem_need = (weight_bytes + (hidden + C_out) * 4
                         + 2 * tm * C_in * itemsize
                         + 2 * tm * C_out * jnp.dtype(out_dtype).itemsize
                         + tm * hidden * 4)
        else:
            # ---- tile the hidden (reduction) axis; f32 VMEM accumulator ----
            Hp = _round_up(hidden, th)
            w1p, b1p, w2p = w1c, b1_2d, w2c
            if Hp != hidden:  # zero-pad: padded hidden columns contribute 0
                w1p = jnp.pad(w1p, ((0, 0), (0, Hp - hidden)))
                b1p = jnp.pad(b1p, ((0, 0), (0, Hp - hidden)))
                w2p = jnp.pad(w2p, ((0, Hp - hidden), (0, 0)))
            kernel = functools.partial(_mlp_kernel_htiled,
                                       approximate_gelu=approximate_gelu)
            grid = (Mp // tm, Hp // th)
            in_specs = [
                pl.BlockSpec((tm, C_in), lambda i, k: (i, 0)),
                pl.BlockSpec((C_in, th), lambda i, k: (0, k)),
                pl.BlockSpec((1, th), lambda i, k: (0, k)),
                pl.BlockSpec((th, C_out), lambda i, k: (k, 0)),
                const_spec((1, C_out), lambda i, k: (0, 0)),
            ]
            out_specs = pl.BlockSpec((tm, C_out), lambda i, k: (i, 0))
            scratch_shapes = [pltpu.VMEM((tm, C_out), jnp.float32)]
            dims = ("parallel", "arbitrary")
            operands = (xc, w1p, b1p, w2p, b2_2d)
            vmem_need = (2 * (C_in * th + th * C_out) * itemsize
                         + 2 * th * 4 + C_out * 4
                         + 2 * tm * C_in * itemsize
                         + 2 * tm * C_out * jnp.dtype(out_dtype).itemsize
                         + tm * C_out * 4 + tm * th * 4)

        vmem_limit = int(min(max(2 * vmem_need, 32 << 20), 64 << 20))

        return pl.pallas_call(
            kernel,
            out_shape=jax.ShapeDtypeStruct((Mp, C_out), out_dtype),
            grid_spec=pltpu.PrefetchScalarGridSpec(
                num_scalar_prefetch=0,
                grid=grid,
                in_specs=in_specs,
                out_specs=out_specs,
                scratch_shapes=scratch_shapes),
            compiler_params=pltpu.CompilerParams(
                dimension_semantics=dims,
                vmem_limit_bytes=vmem_limit),
            cost_estimate=cost,
        )(*operands)

    try:
        # Single-buffer the grid-invariant weight/bias operands (halves their
        # VMEM footprint; constant index_map means no re-DMA is needed).
        out2d = _run(pl.Buffered(1))
    except Exception:
        # Fallback: default (double) buffering if pipeline_mode is unsupported.
        out2d = _run(None)

    if Mp != M:
        out2d = out2d[:M]
    return out2d.reshape(*orig_shape[:-1], C_out)


# --------------------------- reference & init --------------------------------

def init_mlp_params(key, in_features, hidden_features=None, out_features=None,
                    dtype=jnp.float32):
    """Deterministic init mimicking nn.Linear (uniform +/- 1/sqrt(fan_in))."""
    out_features = out_features or in_features
    hidden_features = hidden_features or in_features
    k1, k2, k3, k4 = jax.random.split(key, 4)
    lim1 = 1.0 / math.sqrt(in_features)
    lim2 = 1.0 / math.sqrt(hidden_features)
    w1 = jax.random.uniform(k1, (in_features, hidden_features), dtype, -lim1, lim1)
    b1 = jax.random.uniform(k2, (hidden_features,), dtype, -lim1, lim1)
    w2 = jax.random.uniform(k3, (hidden_features, out_features), dtype, -lim2, lim2)
    b2 = jax.random.uniform(k4, (out_features,), dtype, -lim2, lim2)
    return w1, b1, w2, b2


def mlp_reference(x, w1, b1, w2, b2):
    h = x @ w1 + b1
    h = 0.5 * h * (1.0 + lax.erf(h / jnp.sqrt(2.0)))
    return h @ w2 + b2


if __name__ == "__main__":
    key = jax.random.PRNGKey(0)
    kx, kp = jax.random.split(key)

    # Small ViT-like MLP block: (B, N, C) tokens, lane-dense feature dims.
    B, N, C = 2, 8, 128
    hidden, C_out = 512, 128

    x = jax.random.normal(kx, (B, N, C), jnp.float32)
    w1, b1, w2, b2 = init_mlp_params(kp, C, hidden, C_out)

    y_ref = mlp_reference(x, w1, b1, w2, b2)

    # 1) resident-weight path (v5e/v6e-style), f32 operands, exact GELU.
    y = jax.block_until_ready(mlp_forward(x, w1, b1, w2, b2))
    assert y.shape == (B, N, C_out)
    assert jnp.allclose(y, y_ref, atol=1e-3, rtol=1e-3), "resident path mismatch"

    # 2) hidden-tiled accumulation path (v7x / large-hidden style).
    y_t = jax.block_until_ready(mlp_forward(x, w1, b1, w2, b2, th=256))
    assert jnp.allclose(y_t, y_ref, atol=1e-3, rtol=1e-3), "hidden-tiled mismatch"

    # 3) bf16 MXU operands with f32 accumulation.
    y_bf = jax.block_until_ready(
        mlp_forward(x, w1, b1, w2, b2, compute_dtype=jnp.bfloat16))
    assert jnp.allclose(y_bf, y_ref, atol=5e-2, rtol=5e-2), "bf16 path mismatch"

    print("KERNEL_OK")
</pallas_src>

<mosaic_0001>
module attributes {stable_mosaic.version = 11 : i64} {
  func.func @_mlp_kernel_resident(%arg0: i32, %arg1: memref<16x128xf32, #tpu.memory_space<vmem>>, %arg2: memref<128x512xf32, #tpu.memory_space<vmem>>, %arg3: memref<1x512xf32, #tpu.memory_space<vmem>>, %arg4: memref<512x128xf32, #tpu.memory_space<vmem>>, %arg5: memref<1x128xf32, #tpu.memory_space<vmem>>, %arg6: memref<16x128xf32, #tpu.memory_space<vmem>>) attributes {dimension_semantics = [#tpu.dimension_semantics<parallel>], iteration_bounds = array<i64: 1>, scalar_prefetch = 0 : i64, scratch_operands = 0 : i64, tpu.core_type = #tpu.core_type<tc>, window_params = [{transform_indices = @transform_0, window_bounds = array<i64: 16, 128>}, {pipeline_mode = #tpu.pipeline_mode<synchronous>, transform_indices = @transform_1, window_bounds = array<i64: 128, 512>}, {pipeline_mode = #tpu.pipeline_mode<synchronous>, transform_indices = @transform_2, window_bounds = array<i64: 1, 512>}, {pipeline_mode = #tpu.pipeline_mode<synchronous>, transform_indices = @transform_3, window_bounds = array<i64: 512, 128>}, {pipeline_mode = #tpu.pipeline_mode<synchronous>, transform_indices = @transform_4, window_bounds = array<i64: 1, 128>}, {transform_indices = @transform_5, window_bounds = array<i64: 16, 128>}]} {
    %c0 = arith.constant 0 : index
    %c0_0 = arith.constant 0 : index
    %0 = vector.load %arg1[%c0, %c0_0] : memref<16x128xf32, #tpu.memory_space<vmem>>, vector<16x128xf32>
    %c0_1 = arith.constant 0 : index
    %c0_2 = arith.constant 0 : index
    %1 = vector.load %arg2[%c0_1, %c0_2] : memref<128x512xf32, #tpu.memory_space<vmem>>, vector<128x512xf32>
    %cst = arith.constant dense<0.000000e+00> : vector<16x512xf32>
    %2 = tpu.matmul %0, %1, %cst {dimension_numbers = #tpu.dot_dimension_numbers<[1], [0], [0], [1], [0, 0, 1, 1], [], []>} : vector<16x128xf32>, vector<128x512xf32>, vector<16x512xf32> -> vector<16x512xf32>
    %c0_3 = arith.constant 0 : index
    %c0_4 = arith.constant 0 : index
    %3 = vector.load %arg3[%c0_3, %c0_4] : memref<1x512xf32, #tpu.memory_space<vmem>>, vector<1x512xf32>
    %4 = vector.broadcast %3 : vector<1x512xf32> to vector<16x512xf32>
    %5 = arith.addf %2, %4 : vector<16x512xf32>
    %cst_5 = arith.constant 5.000000e-01 : f32
    %6 = vector.broadcast %cst_5 : f32 to vector<16x512xf32>
    %7 = arith.mulf %6, %5 : vector<16x512xf32>
    %cst_6 = arith.constant 0.707106769 : f32
    %8 = vector.broadcast %cst_6 : f32 to vector<16x512xf32>
    %9 = arith.mulf %5, %8 : vector<16x512xf32>
    %10 = math.erf %9 : vector<16x512xf32>
    %cst_7 = arith.constant 1.000000e+00 : f32
    %11 = vector.broadcast %cst_7 : f32 to vector<16x512xf32>
    %12 = arith.addf %11, %10 : vector<16x512xf32>
    %13 = arith.mulf %7, %12 : vector<16x512xf32>
    %c0_8 = arith.constant 0 : index
    %c0_9 = arith.constant 0 : index
    %14 = vector.load %arg4[%c0_8, %c0_9] : memref<512x128xf32, #tpu.memory_space<vmem>>, vector<512x128xf32>
    %cst_10 = arith.constant dense<0.000000e+00> : vector<16x128xf32>
    %15 = tpu.matmul %13, %14, %cst_10 {dimension_numbers = #tpu.dot_dimension_numbers<[1], [0], [0], [1], [0, 0, 1, 1], [], []>} : vector<16x512xf32>, vector<512x128xf32>, vector<16x128xf32> -> vector<16x128xf32>
    %c0_11 = arith.constant 0 : index
    %c0_12 = arith.constant 0 : index
    %16 = vector.load %arg5[%c0_11, %c0_12] : memref<1x128xf32, #tpu.memory_space<vmem>>, vector<1x128xf32>
    %17 = vector.broadcast %16 : vector<1x128xf32> to vector<16x128xf32>
    %18 = arith.addf %15, %17 : vector<16x128xf32>
    %c0_13 = arith.constant 0 : index
    %c0_14 = arith.constant 0 : index
    %19 = vector.load %arg6[%c0_13, %c0_14] : memref<16x128xf32, #tpu.memory_space<vmem>>, vector<16x128xf32>
    tpu.vector_store %arg6[%c0_13, %c0_14], %18 {strides = array<i32>} : memref<16x128xf32, #tpu.memory_space<vmem>>, vector<16x128xf32>,
    return
  }
  func.func @transform_0(%arg0: i32) -> (i32, i32) {
    %c0_i32 = arith.constant 0 : i32
    %c0_i32_0 = arith.constant 0 : i32
    return %arg0, %c0_i32 : i32, i32
  }
  func.func @transform_1(%arg0: i32) -> (i32, i32) {
    %c0_i32 = arith.constant 0 : i32
    %c0_i32_0 = arith.constant 0 : i32
    %c0_i32_1 = arith.constant 0 : i32
    return %c0_i32, %c0_i32_0 : i32, i32
  }
  func.func @transform_2(%arg0: i32) -> (i32, i32) {
    %c0_i32 = arith.constant 0 : i32
    %c0_i32_0 = arith.constant 0 : i32
    %c0_i32_1 = arith.constant 0 : i32
    return %c0_i32, %c0_i32_0 : i32, i32
  }
  func.func @transform_3(%arg0: i32) -> (i32, i32) {
    %c0_i32 = arith.constant 0 : i32
    %c0_i32_0 = arith.constant 0 : i32
    %c0_i32_1 = arith.constant 0 : i32
    return %c0_i32, %c0_i32_0 : i32, i32
  }
  func.func @transform_4(%arg0: i32) -> (i32, i32) {
    %c0_i32 = arith.constant 0 : i32
    %c0_i32_0 = arith.constant 0 : i32
    %c0_i32_1 = arith.constant 0 : i32
    return %c0_i32, %c0_i32_0 : i32, i32
  }
  func.func @transform_5(%arg0: i32) -> (i32, i32) {
    %c0_i32 = arith.constant 0 : i32
    %c0_i32_0 = arith.constant 0 : i32
    return %arg0, %c0_i32 : i32, i32
  }
}

module attributes {stable_mosaic.version = 11 : i64} {
  func.func @_mlp_kernel_resident(%arg0: i32, %arg1: memref<16x128xf32, #tpu.memory_space<vmem>>, %arg2: memref<128x512xf32, #tpu.memory_space<vmem>>, %arg3: memref<1x512xf32, #tpu.memory_space<vmem>>, %arg4: memref<512x128xf32, #tpu.memory_space<vmem>>, %arg5: memref<1x128xf32, #tpu.memory_space<vmem>>, %arg6: memref<16x128xf32, #tpu.memory_space<vmem>>) attributes {dimension_semantics = [#tpu.dimension_semantics<parallel>], iteration_bounds = array<i64: 1>, scalar_prefetch = 0 : i64, scratch_operands = 0 : i64, tpu.core_type = #tpu.core_type<tc>, window_params = [{transform_indices = @transform_0, window_bounds = array<i64: 16, 128>}, {pipeline_mode = #tpu.pipeline_mode<synchronous>, transform_indices = @transform_1, window_bounds = array<i64: 128, 512>}, {pipeline_mode = #tpu.pipeline_mode<synchronous>, transform_indices = @transform_2, window_bounds = array<i64: 1, 512>}, {pipeline_mode = #tpu.pipeline_mode<synchronous>, transform_indices = @transform_3, window_bounds = array<i64: 512, 128>}, {pipeline_mode = #tpu.pipeline_mode<synchronous>, transform_indices = @transform_4, window_bounds = array<i64: 1, 128>}, {transform_indices = @transform_5, window_bounds = array<i64: 16, 128>}]} {
    %c0 = arith.constant 0 : index
    %c0_0 = arith.constant 0 : index
    %0 = vector.load %arg1[%c0, %c0_0] : memref<16x128xf32, #tpu.memory_space<vmem>>, vector<16x128xf32>
    %c0_1 = arith.constant 0 : index
    %c0_2 = arith.constant 0 : index
    %1 = vector.load %arg2[%c0_1, %c0_2] : memref<128x512xf32, #tpu.memory_space<vmem>>, vector<128x512xf32>
    %cst = arith.constant dense<0.000000e+00> : vector<16x512xf32>
    %2 = tpu.matmul %0, %1, %cst {dimension_numbers = #tpu.dot_dimension_numbers<[1], [0], [0], [1], [0, 0, 1, 1], [], []>} : vector<16x128xf32>, vector<128x512xf32>, vector<16x512xf32> -> vector<16x512xf32>
    %c0_3 = arith.constant 0 : index
    %c0_4 = arith.constant 0 : index
    %3 = vector.load %arg3[%c0_3, %c0_4] : memref<1x512xf32, #tpu.memory_space<vmem>>, vector<1x512xf32>
    %4 = vector.broadcast %3 : vector<1x512xf32> to vector<16x512xf32>
    %5 = arith.addf %2, %4 : vector<16x512xf32>
    %cst_5 = arith.constant 5.000000e-01 : f32
    %6 = vector.broadcast %cst_5 : f32 to vector<16x512xf32>
    %7 = arith.mulf %6, %5 : vector<16x512xf32>
    %cst_6 = arith.constant 0.707106769 : f32
    %8 = vector.broadcast %cst_6 : f32 to vector<16x512xf32>
    %9 = arith.mulf %5, %8 : vector<16x512xf32>
    %10 = math.erf %9 : vector<16x512xf32>
    %cst_7 = arith.constant 1.000000e+00 : f32
    %11 = vector.broadcast %cst_7 : f32 to vector<16x512xf32>
    %12 = arith.addf %11, %10 : vector<16x512xf32>
    %13 = arith.mulf %7, %12 : vector<16x512xf32>
    %c0_8 = arith.constant 0 : index
    %c0_9 = arith.constant 0 : index
    %14 = vector.load %arg4[%c0_8, %c0_9] : memref<512x128xf32, #tpu.memory_space<vmem>>, vector<512x128xf32>
    %cst_10 = arith.constant dense<0.000000e+00> : vector<16x128xf32>
    %15 = tpu.matmul %13, %14, %cst_10 {dimension_numbers = #tpu.dot_dimension_numbers<[1], [0], [0], [1], [0, 0, 1, 1], [], []>} : vector<16x512xf32>, vector<512x128xf32>, vector<16x128xf32> -> vector<16x128xf32>
    %c0_11 = arith.constant 0 : index
    %c0_12 = arith.constant 0 : index
    %16 = vector.load %arg5[%c0_11, %c0_12] : memref<1x128xf32, #tpu.memory_space<vmem>>, vector<1x128xf32>
    %17 = vector.broadcast %16 : vector<1x128xf32> to vector<16x128xf32>
    %18 = arith.addf %15, %17 : vector<16x128xf32>
    %c0_13 = arith.constant 0 : index
    %c0_14 = arith.constant 0 : index
    %19 = vector.load %arg6[%c0_13, %c0_14] : memref<16x128xf32, #tpu.memory_space<vmem>>, vector<16x128xf32>
    tpu.vector_store %arg6[%c0_13, %c0_14], %18 {strides = array<i32>} : memref<16x128xf32, #tpu.memory_space<vmem>>, vector<16x128xf32>,
    return
  }
  func.func @transform_0(%arg0: i32) -> (i32, i32) {
    %c0_i32 = arith.constant 0 : i32
    %c0_i32_0 = arith.constant 0 : i32
    return %arg0, %c0_i32 : i32, i32
  }
  func.func @transform_1(%arg0: i32) -> (i32, i32) {
    %c0_i32 = arith.constant 0 : i32
    %c0_i32_0 = arith.constant 0 : i32
    %c0_i32_1 = arith.constant 0 : i32
    return %c0_i32, %c0_i32_0 : i32, i32
  }
  func.func @transform_2(%arg0: i32) -> (i32, i32) {
    %c0_i32 = arith.constant 0 : i32
    %c0_i32_0 = arith.constant 0 : i32
    %c0_i32_1 = arith.constant 0 : i32
    return %c0_i32, %c0_i32_0 : i32, i32
  }
  func.func @transform_3(%arg0: i32) -> (i32, i32) {
    %c0_i32 = arith.constant 0 : i32
    %c0_i32_0 = arith.constant 0 : i32
    %c0_i32_1 = arith.constant 0 : i32
    return %c0_i32, %c0_i32_0 : i32, i32
  }
  func.func @transform_4(%arg0: i32) -> (i32, i32) {
    %c0_i32 = arith.constant 0 : i32
    %c0_i32_0 = arith.constant 0 : i32
    %c0_i32_1 = arith.constant 0 : i32
    return %c0_i32, %c0_i32_0 : i32, i32
  }
  func.func @transform_5(%arg0: i32) -> (i32, i32) {
    %c0_i32 = arith.constant 0 : i32
    %c0_i32_0 = arith.constant 0 : i32
    return %arg0, %c0_i32 : i32, i32
  }
}

</mosaic_0001>

<llo_original>
// kernel: tpu_custom_call.1
$region0: #{tpu_custom_call.1}
  #allocation0 [shape = 'u32[]', space=smem, size = 0x4, offset = 0x4, fixed_abs, tag = 'smem constant byte address 0x4 - core index']
  #allocation1 [shape = 'u32[144,128]{1,0:T(1,128)}', space=vmem, size = 0x12000, scoped, tag = 'internal scratch']
  %s0 = inlined_call_operand.hbm [shape: f32[16,128], index: 0, kind: input, shape index: {}]
  %s1 = inlined_call_operand.hbm [shape: f32[128,512], index: 1, kind: input, shape index: {}]
  %s2 = inlined_call_operand.vmem [shape: f32[1,512], index: 2, kind: input, shape index: {}]
  %s3 = inlined_call_operand.hbm [shape: f32[512,128], index: 3, kind: input, shape index: {}]
  %s4 = inlined_call_operand.vmem [shape: f32[1,128], index: 4, kind: input, shape index: {}]
  %s5 = inlined_call_operand.hbm [shape: f32[16,128], index: 5, kind: output, shape index: {}]
  %s6 = sld [smem:[#allocation0]]
  $region42: #{tpu_custom_call.1} parent=0
    _
  %s8 = ssub.s32 1, %s6
  %s9 = scalar_select 0, %s8, %s6
  $region1: #{tpu_custom_call.1} parent=0
    #allocation2 [shape = 'u8[8192]{0}', space=vmem, size = 0x2000, scoped, tag = 'input window, operand 0, single buffered']
    #allocation3 [shape = 's32[1]{0}', space=sflag, size = 0x4, scoped, tag = 'scoped memory for tpu_custom_call.1']
    #allocation4 [shape = 's32[1]{0}', space=sflag, size = 0x4, scoped, tag = 'scoped memory for tpu_custom_call.1']
    #allocation5 [shape = 'u8[262144]{0}', space=vmem, size = 0x40000, scoped, tag = 'input window, operand 1, single buffered']
    #allocation6 [shape = 's32[1]{0}', space=sflag, size = 0x4, scoped, tag = 'scoped memory for tpu_custom_call.1']
    #allocation7 [shape = 'u8[262144]{0}', space=vmem, size = 0x40000, scoped, tag = 'input window, operand 3, single buffered']
    #allocation8 [shape = 'u8[8192]{0}', space=vmem, size = 0x2000, scoped, tag = 'output window, operand 0, single buffered']
    %10 = vsyncpa [#allocation3], 0
    %11 = vsyncpa [#allocation6], 0
    %12 = vsyncpa [#allocation4], 0
    // Predicated region
    $region2: #{tpu_custom_call.1} parent=1 // pred_check
      _
    $region3: #{tpu_custom_call.1} parent=1 // pred_check_branch
      %14 = sbr.rel (0) target = $region5
    $region4: #{tpu_custom_call.1} parent=1 // pred_region
      %s16 = ssub.s32 256, 256
      %17 = vsyncadd [#allocation3], %s16
      %s18 = sshll.u32 [#allocation2], 4
      %s19 = int_to_ptr.vmem [resolvable:$true] %s18
      %24 = dma.hbm_to_vmem [thread:$0]  %s0, 256, %s19, [#allocation3], 128, 128, 8
    $region5: #{tpu_custom_call.1} parent=1 // pred_fallthru
      _
    // Predicated region
    $region6: #{tpu_custom_call.1} parent=1 // pred_check
      _
    $region7: #{tpu_custom_call.1} parent=1 // pred_check_branch
      %26 = sbr.rel (0) target = $region9
    $region8: #{tpu_custom_call.1} parent=1 // pred_region
      %s28 = ssub.s32 8192, 8192
      %29 = vsyncadd [#allocation6], %s28
      %s30 = sshll.u32 [#allocation5], 4
      %s31 = int_to_ptr.vmem [resolvable:$true] %s30
      %36 = dma.hbm_to_vmem [thread:$0]  %s1, 8192, %s31, [#allocation6], 512, 512, 32
    $region9: #{tpu_custom_call.1} parent=1 // pred_fallthru
      _
    // Predicated region
    $region10: #{tpu_custom_call.1} parent=1 // pred_check
      _
    $region11: #{tpu_custom_call.1} parent=1 // pred_check_branch
      %38 = sbr.rel (0) target = $region13
    $region12: #{tpu_custom_call.1} parent=1 // pred_region
      _
    $region13: #{tpu_custom_call.1} parent=1 // pred_fallthru
      _
    // Predicated region
    $region14: #{tpu_custom_call.1} parent=1 // pred_check
      _
    $region15: #{tpu_custom_call.1} parent=1 // pred_check_branch
      %40 = sbr.rel (0) target = $region17
    $region16: #{tpu_custom_call.1} parent=1 // pred_region
      %s42 = ssub.s32 8192, 8192
      %43 = vsyncadd [#allocation6], %s42
      %s44 = sshll.u32 [#allocation7], 4
      %s45 = int_to_ptr.vmem [resolvable:$true] %s44
      %50 = dma.hbm_to_vmem [thread:$0]  %s3, 8192, %s45, [#allocation6], 128, 128, 8
    $region17: #{tpu_custom_call.1} parent=1 // pred_fallthru
      _
    // Predicated region
    $region18: #{tpu_custom_call.1} parent=1 // pred_check
      _
    $region19: #{tpu_custom_call.1} parent=1 // pred_check_branch
      %52 = sbr.rel (0) target = $region21
    $region20: #{tpu_custom_call.1} parent=1 // pred_region
      _
    $region21: #{tpu_custom_call.1} parent=1 // pred_fallthru
      _
    // Predicated region
    $region22: #{tpu_custom_call.1} parent=1 // pred_check
      _
    $region23: #{tpu_custom_call.1} parent=1 // pred_check_branch
      %54 = sbr.rel (0) target = $region25
    $region24: #{tpu_custom_call.1} parent=1 // pred_region
      %55 = dma.done [#allocation3], 256
    $region25: #{tpu_custom_call.1} parent=1 // pred_fallthru
      _
    // Predicated region
    $region26: #{tpu_custom_call.1} parent=1 // pred_check
      _
    $region27: #{tpu_custom_call.1} parent=1 // pred_check_branch
      %57 = sbr.rel (0) target = $region29
    $region28: #{tpu_custom_call.1} parent=1 // pred_region
      %58 = dma.done [#allocation6], 8192
    $region29: #{tpu_custom_call.1} parent=1 // pred_fallthru
      _
    // Predicated region
    $region30: #{tpu_custom_call.1} parent=1 // pred_check
      _
    $region31: #{tpu_custom_call.1} parent=1 // pred_check_branch
      %60 = sbr.rel (0) target = $region33
    $region32: #{tpu_custom_call.1} parent=1 // pred_region
      %61 = dma.done [#allocation6], 8192
    $region33: #{tpu_custom_call.1} parent=1 // pred_fallthru
      _
    %v62 = vld [vmem:[#allocation2] sm:$0xff]
    %v63 = vld [vmem:[#allocation2 + $0x8] sm:$0xff]
    %v64 = vld [vmem:[#allocation5] sm:$0xff]
    %v65 = vld [vmem:[#allocation5 + $0x8] sm:$0xff]
    %v66 = vld [vmem:[#allocation5 + $0x10] sm:$0xff]
    %v67 = vld [vmem:[#allocation5 + $0x18] sm:$0xff]
    %v68 = vld [vmem:[#allocation5 + $0x20] sm:$0xff]
    %v69 = vld [vmem:[#allocation5 + $0x28] sm:$0xff]
    %v70 = vld [vmem:[#allocation5 + $0x30] sm:$0xff]
    %v71 = vld [vmem:[#allocation5 + $0x38] sm:$0xff]
    %v72 = vld [vmem:[#allocation5 + $0x40] sm:$0xff]
    %v73 = vld [vmem:[#allocation5 + $0x48] sm:$0xff]
    %v74 = vld [vmem:[#allocation5 + $0x50] sm:$0xff]
    %v75 = vld [vmem:[#allocation5 + $0x58] sm:$0xff]
    %v76 = vld [vmem:[#allocation5 + $0x60] sm:$0xff]
    %v77 = vld [vmem:[#allocation5 + $0x68] sm:$0xff]
    %v78 = vld [vmem:[#allocation5 + $0x70] sm:$0xff]
    %v79 = vld [vmem:[#allocation5 + $0x78] sm:$0xff]
    %v80 = vld [vmem:[#allocation5 + $0x80] sm:$0xff]
    %v81 = vld [vmem:[#allocation5 + $0x88] sm:$0xff]
    %v82 = vld [vmem:[#allocation5 + $0x90] sm:$0xff]
    %v83 = vld [vmem:[#allocation5 + $0x98] sm:$0xff]
    %v84 = vld [vmem:[#allocation5 + $0xa0] sm:$0xff]
    %v85 = vld [vmem:[#allocation5 + $0xa8] sm:$0xff]
    %v86 = vld [vmem:[#allocation5 + $0xb0] sm:$0xff]
    %v87 = vld [vmem:[#allocation5 + $0xb8] sm:$0xff]
    %v88 = vld [vmem:[#allocation5 + $0xc0] sm:$0xff]
    %v89 = vld [vmem:[#allocation5 + $0xc8] sm:$0xff]
    %v90 = vld [vmem:[#allocation5 + $0xd0] sm:$0xff]
    %v91 = vld [vmem:[#allocation5 + $0xd8] sm:$0xff]
    %v92 = vld [vmem:[#allocation5 + $0xe0] sm:$0xff]
    %v93 = vld [vmem:[#allocation5 + $0xe8] sm:$0xff]
    %v94 = vld [vmem:[#allocation5 + $0xf0] sm:$0xff]
    %v95 = vld [vmem:[#allocation5 + $0xf8] sm:$0xff]
    %v96 = vld [vmem:[#allocation5 + $0x100] sm:$0xff]
    %v97 = vld [vmem:[#allocation5 + $0x108] sm:$0xff]
    %v98 = vld [vmem:[#allocation5 + $0x110] sm:$0xff]
    %v99 = vld [vmem:[#allocation5 + $0x118] sm:$0xff]
    %v100 = vld [vmem:[#allocation5 + $0x120] sm:$0xff]
    %v101 = vld [vmem:[#allocation5 + $0x128] sm:$0xff]
    %v102 = vld [vmem:[#allocation5 + $0x130] sm:$0xff]
    %v103 = vld [vmem:[#allocation5 + $0x138] sm:$0xff]
    %v104 = vld [vmem:[#allocation5 + $0x140] sm:$0xff]
    %v105 = vld [vmem:[#allocation5 + $0x148] sm:$0xff]
    %v106 = vld [vmem:[#allocation5 + $0x150] sm:$0xff]
    %v107 = vld [vmem:[#allocation5 + $0x158] sm:$0xff]
    %v108 = vld [vmem:[#allocation5 + $0x160] sm:$0xff]
    %v109 = vld [vmem:[#allocation5 + $0x168] sm:$0xff]
    %v110 = vld [vmem:[#allocation5 + $0x170] sm:$0xff]
    %v111 = vld [vmem:[#allocation5 + $0x178] sm:$0xff]
    %v112 = vld [vmem:[#allocation5 + $0x180] sm:$0xff]
    %v113 = vld [vmem:[#allocation5 + $0x188] sm:$0xff]
    %v114 = vld [vmem:[#allocation5 + $0x190] sm:$0xff]
    %v115 = vld [vmem:[#allocation5 + $0x198] sm:$0xff]
    %v116 = vld [vmem:[#allocation5 + $0x1a0] sm:$0xff]
    %v117 = vld [vmem:[#allocation5 + $0x1a8] sm:$0xff]
    %v118 = vld [vmem:[#allocation5 + $0x1b0] sm:$0xff]
    %v119 = vld [vmem:[#allocation5 + $0x1b8] sm:$0xff]
    %v120 = vld [vmem:[#allocation5 + $0x1c0] sm:$0xff]
    %v121 = vld [vmem:[#allocation5 + $0x1c8] sm:$0xff]
    %v122 = vld [vmem:[#allocation5 + $0x1d0] sm:$0xff]
    %v123 = vld [vmem:[#allocation5 + $0x1d8] sm:$0xff]
    %v124 = vld [vmem:[#allocation5 + $0x1e0] sm:$0xff]
    %v125 = vld [vmem:[#allocation5 + $0x1e8] sm:$0xff]
    %v126 = vld [vmem:[#allocation5 + $0x1f0] sm:$0xff]
    %v127 = vld [vmem:[#allocation5 + $0x1f8] sm:$0xff]
    %v128 = vld [vmem:[%s2] sm:$0xf]
    %v130 = vlaneseq
    %v131 = vshrl.u32 %v130, 7
    %v132 = vsub.s32 0, %v131
    %v133 = vrot.slane %v128, %v132
    %v134 = vlaneseq
    %v135 = vshrl.u32 %v134, 7
    %v136 = vsub.s32 1, %v135
    %v137 = vrot.slane %v128, %v136
    %v138 = vlaneseq
    %v139 = vshrl.u32 %v138, 7
    %v140 = vsub.s32 2, %v139
    %v141 = vrot.slane %v128, %v140
    %v142 = vlaneseq
    %v143 = vshrl.u32 %v142, 7
    %v144 = vsub.s32 3, %v143
    %v145 = vrot.slane %v128, %v144
    %150 = vmatprep.subr.mxu0 %v65
    %151 = vmatpush1.msra.mxu0 %v64
    %152 = vmatprep.subr.mxu0 %v69
    %153 = vmatpush1.msra.mxu0 %v68
    %154 = vmatprep.subr.mxu0 %v73
    %155 = vmatpush1.msra.mxu0 %v72
    %156 = vmatprep.subr.mxu0 %v77
    %157 = vmatpush1.msra.mxu0 %v76
    %158 = vmatprep.subr.mxu0 %v81
    %159 = vmatpush1.msra.mxu0 %v80
    %160 = vmatprep.subr.mxu0 %v85
    %161 = vmatpush1.msra.mxu0 %v84
    %162 = vmatprep.subr.mxu0 %v89
    %163 = vmatpush1.msra.mxu0 %v88
    %164 = vmatprep.subr.mxu0 %v93
    %165 = vmatpush1.msra.mxu0 %v92
    %166 = vmatprep.subr.mxu0 %v97
    %167 = vmatpush1.msra.mxu0 %v96
    %168 = vmatprep.subr.mxu0 %v101
    %169 = vmatpush1.msra.mxu0 %v100
    %170 = vmatprep.subr.mxu0 %v105
    %171 = vmatpush1.msra.mxu0 %v104
    %172 = vmatprep.subr.mxu0 %v109
    %173 = vmatpush1.msra.mxu0 %v108
    %174 = vmatprep.subr.mxu0 %v113
    %175 = vmatpush1.msra.mxu0 %v112
    %176 = vmatprep.subr.mxu0 %v117
    %177 = vmatpush1.msra.mxu0 %v116
    %178 = vmatprep.subr.mxu0 %v121
    %179 = vmatpush1.msra.mxu0 %v120
    %180 = vmatprep.subr.mxu0 %v125
    %181 = vmatpush1.msra.mxu0 %v124
    %182 = vmatprep.subr.mxu0 0.0
    %183 = vmatpush1.msra.mxu0 0.0
    %184 = vmatprep.subr.mxu0 0.0
    %185 = vmatpush1.msra.mxu0 0.0
    %186 = vmatprep.subr.mxu0 0.0
    %187 = vmatpush1.msra.mxu0 0.0
    %188 = vmatprep.subr.mxu0 0.0
    %189 = vmatpush1.msra.mxu0 0.0
    %190 = vmatprep.subr.mxu0 0.0
    %191 = vmatpush1.msra.mxu0 0.0
    %192 = vmatprep.subr.mxu0 0.0
    %193 = vmatpush1.msra.mxu0 0.0
    %194 = vmatprep.subr.mxu0 0.0
    %195 = vmatpush1.msra.mxu0 0.0
    %196 = vmatprep.subr.mxu0 0.0
    %197 = vmatpush1.msra.mxu0 0.0
    %198 = vmatprep.subr.mxu0 0.0
    %199 = vmatpush1.msra.mxu0 0.0
    %200 = vmatprep.subr.mxu0 0.0
    %201 = vmatpush1.msra.mxu0 0.0
    %202 = vmatprep.subr.mxu0 0.0
    %203 = vmatpush1.msra.mxu0 0.0
    %204 = vmatprep.subr.mxu0 0.0
    %205 = vmatpush1.msra.mxu0 0.0
    %206 = vmatprep.subr.mxu0 0.0
    %207 = vmatpush1.msra.mxu0 0.0
    %208 = vmatprep.subr.mxu0 0.0
    %209 = vmatpush1.msra.mxu0 0.0
    %210 = vmatprep.subr.mxu0 0.0
    %211 = vmatpush1.msra.mxu0 0.0
    %212 = vmatprep.subr.mxu0 0.0
    %213 = vmatpush1.msra.mxu0 0.0
    %214 = vmatprep.mubr.f32.mxu0 0.0
    %215 = vmatmul.mubr.f32.gmra.mrb[0].mxu0 %v62
    %v216 = vpop.f32.mrb[0].mxu0
    %v217 = vadd.f32 %v133, %v216
    %v218 = vpop.f32.mrb[0].mxu0
    %v219 = vadd.f32 %v137, %v218
    %220 = vmatprep.mubr.f32.mxu0 0.0
    %221 = vmatmul.mubr.f32.gmra.mrb[0].mxu0 %v63
    %v222 = vpop.f32.mrb[0].mxu0
    %v223 = vadd.f32 %v133, %v222
    %v224 = vpop.f32.mrb[0].mxu0
    %v225 = vadd.f32 %v137, %v224
    %226 = vdwg.mxu0
    %227 = vmatprep.subr.mxu0 %v67
    %228 = vmatpush1.msra.mxu0 %v66
    %229 = vmatprep.subr.mxu0 %v71
    %230 = vmatpush1.msra.mxu0 %v70
    %231 = vmatprep.subr.mxu0 %v75
    %232 = vmatpush1.msra.mxu0 %v74
    %233 = vmatprep.subr.mxu0 %v79
    %234 = vmatpush1.msra.mxu0 %v78
    %235 = vmatprep.subr.mxu0 %v83
    %236 = vmatpush1.msra.mxu0 %v82
    %237 = vmatprep.subr.mxu0 %v87
    %238 = vmatpush1.msra.mxu0 %v86
    %239 = vmatprep.subr.mxu0 %v91
    %240 = vmatpush1.msra.mxu0 %v90
    %241 = vmatprep.subr.mxu0 %v95
    %242 = vmatpush1.msra.mxu0 %v94
    %243 = vmatprep.subr.mxu0 %v99
    %244 = vmatpush1.msra.mxu0 %v98
    %245 = vmatprep.subr.mxu0 %v103
    %246 = vmatpush1.msra.mxu0 %v102
    %247 = vmatprep.subr.mxu0 %v107
    %248 = vmatpush1.msra.mxu0 %v106
    %249 = vmatprep.subr.mxu0 %v111
    %250 = vmatpush1.msra.mxu0 %v110
    %251 = vmatprep.subr.mxu0 %v115
    %252 = vmatpush1.msra.mxu0 %v114
    %253 = vmatprep.subr.mxu0 %v119
    %254 = vmatpush1.msra.mxu0 %v118
    %255 = vmatprep.subr.mxu0 %v123
    %256 = vmatpush1.msra.mxu0 %v122
    %257 = vmatprep.subr.mxu0 %v127
    %258 = vmatpush1.msra.mxu0 %v126
    %259 = vmatprep.subr.mxu0 0.0
    %260 = vmatpush1.msra.mxu0 0.0
    %261 = vmatprep.subr.mxu0 0.0
    %262 = vmatpush1.msra.mxu0 0.0
    %263 = vmatprep.subr.mxu0 0.0
    %264 = vmatpush1.msra.mxu0 0.0
    %265 = vmatprep.subr.mxu0 0.0
    %266 = vmatpush1.msra.mxu0 0.0
    %267 = vmatprep.subr.mxu0 0.0
    %268 = vmatpush1.msra.mxu0 0.0
    %269 = vmatprep.subr.mxu0 0.0
    %270 = vmatpush1.msra.mxu0 0.0
    %271 = vmatprep.subr.mxu0 0.0
    %272 = vmatpush1.msra.mxu0 0.0
    %273 = vmatprep.subr.mxu0 0.0
    %274 = vmatpush1.msra.mxu0 0.0
    %275 = vmatprep.subr.mxu0 0.0
    %276 = vmatpush1.msra.mxu0 0.0
    %277 = vmatprep.subr.mxu0 0.0
    %278 = vmatpush1.msra.mxu0 0.0
    %279 = vmatprep.subr.mxu0 0.0
    %280 = vmatpush1.msra.mxu0 0.0
    %281 = vmatprep.subr.mxu0 0.0
    %282 = vmatpush1.msra.mxu0 0.0
    %283 = vmatprep.subr.mxu0 0.0
    %284 = vmatpush1.msra.mxu0 0.0
    %285 = vmatprep.subr.mxu0 0.0
    %286 = vmatpush1.msra.mxu0 0.0
    %287 = vmatprep.subr.mxu0 0.0
    %288 = vmatpush1.msra.mxu0 0.0
    %289 = vmatprep.subr.mxu0 0.0
    %290 = vmatpush1.msra.mxu0 0.0
    %291 = vmatprep.mubr.f32.mxu0 0.0
    %292 = vmatmul.mubr.f32.gmra.mrb[0].mxu0 %v62
    %v293 = vpop.f32.mrb[0].mxu0
    %v294 = vadd.f32 %v141, %v293
    %v295 = vpop.f32.mrb[0].mxu0
    %v296 = vadd.f32 %v145, %v295
    %297 = vmatprep.mubr.f32.mxu0 0.0
    %298 = vmatmul.mubr.f32.gmra.mrb[0].mxu0 %v63
    %v299 = vpop.f32.mrb[0].mxu0
    %v300 = vadd.f32 %v141, %v299
    %v301 = vpop.f32.mrb[0].mxu0
    %v302 = vadd.f32 %v145, %v301
    %303 = vdwg.mxu0
    %v304 = vmul.f32 %v217, 0.5
    %v305 = vmul.f32 %v219, 0.5
    %v306 = vmul.f32 %v294, 0.5
    %v307 = vmul.f32 %v296, 0.5
    %v308 = vmul.f32 %v223, 0.5
    %v309 = vmul.f32 %v225, 0.5
    %v310 = vmul.f32 %v300, 0.5
    %v311 = vmul.f32 %v302, 0.5
    %v312 = vmul.f32 %v217, 0.70710677
    %v313 = vmul.f32 %v219, 0.70710677
    %v314 = vmul.f32 %v294, 0.70710677
    %v315 = vmul.f32 %v296, 0.70710677
    %v316 = vmul.f32 %v223, 0.70710677
    %v317 = vmul.f32 %v225, 0.70710677
    %v318 = vmul.f32 %v300, 0.70710677
    %v319 = vmul.f32 %v302, 0.70710677
    %v320 = verf.f32.pop %v312
    %v321 = verf.f32.pop %v313
    %v322 = verf.f32.pop %v314
    %v323 = verf.f32.pop %v315
    %v324 = verf.f32.pop %v316
    %v325 = verf.f32.pop %v317
    %v326 = verf.f32.pop %v318
    %v327 = verf.f32.pop %v319
    %v328 = vadd.f32 %v320, 1.0
    %v329 = vadd.f32 %v321, 1.0
    %v330 = vadd.f32 %v322, 1.0
    %v331 = vadd.f32 %v323, 1.0
    %v332 = vadd.f32 %v324, 1.0
    %v333 = vadd.f32 %v325, 1.0
    %v334 = vadd.f32 %v326, 1.0
    %v335 = vadd.f32 %v327, 1.0
    %v336 = vmul.f32 %v304, %v328
    %v337 = vmul.f32 %v305, %v329
    %v338 = vmul.f32 %v306, %v330
    %v339 = vmul.f32 %v307, %v331
    %v340 = vmul.f32 %v308, %v332
    %v341 = vmul.f32 %v309, %v333
    %v342 = vmul.f32 %v310, %v334
    %v343 = vmul.f32 %v311, %v335
    %v344 = vld [vmem:[#allocation7] sm:$0xff]
    %v345 = vld [vmem:[#allocation7 + $0x8] sm:$0xff]
    %v346 = vld [vmem:[#allocation7 + $0x10] sm:$0xff]
    %v347 = vld [vmem:[#allocation7 + $0x18] sm:$0xff]
    %v348 = vld [vmem:[#allocation7 + $0x20] sm:$0xff]
    %v349 = vld [vmem:[#allocation7 + $0x28] sm:$0xff]
    %v350 = vld [vmem:[#allocation7 + $0x30] sm:$0xff]
    %v351 = vld [vmem:[#allocation7 + $0x38] sm:$0xff]
    %v352 = vld [vmem:[#allocation7 + $0x40] sm:$0xff]
    %v353 = vld [vmem:[#allocation7 + $0x48] sm:$0xff]
    %v354 = vld [vmem:[#allocation7 + $0x50] sm:$0xff]
    %v355 = vld [vmem:[#allocation7 + $0x58] sm:$0xff]
    %v356 = vld [vmem:[#allocation7 + $0x60] sm:$0xff]
    %v357 = vld [vmem:[#allocation7 + $0x68] sm:$0xff]
    %v358 = vld [vmem:[#allocation7 + $0x70] sm:$0xff]
    %v359 = vld [vmem:[#allocation7 + $0x78] sm:$0xff]
    %v360 = vld [vmem:[#allocation7 + $0x80] sm:$0xff]
    %v361 = vld [vmem:[#allocation7 + $0x88] sm:$0xff]
    %v362 = vld [vmem:[#allocation7 + $0x90] sm:$0xff]
    %v363 = vld [vmem:[#allocation7 + $0x98] sm:$0xff]
    %v364 = vld [vmem:[#allocation7 + $0xa0] sm:$0xff]
    %v365 = vld [vmem:[#allocation7 + $0xa8] sm:$0xff]
    %v366 = vld [vmem:[#allocation7 + $0xb0] sm:$0xff]
    %v367 = vld [vmem:[#allocation7 + $0xb8] sm:$0xff]
    %v368 = vld [vmem:[#allocation7 + $0xc0] sm:$0xff]
    %v369 = vld [vmem:[#allocation7 + $0xc8] sm:$0xff]
    %v370 = vld [vmem:[#allocation7 + $0xd0] sm:$0xff]
    %v371 = vld [vmem:[#allocation7 + $0xd8] sm:$0xff]
    %v372 = vld [vmem:[#allocation7 + $0xe0] sm:$0xff]
    %v373 = vld [vmem:[#allocation7 + $0xe8] sm:$0xff]
    %v374 = vld [vmem:[#allocation7 + $0xf0] sm:$0xff]
    %v375 = vld [vmem:[#allocation7 + $0xf8] sm:$0xff]
    %v376 = vld [vmem:[#allocation7 + $0x100] sm:$0xff]
    %v377 = vld [vmem:[#allocation7 + $0x108] sm:$0xff]
    %v378 = vld [vmem:[#allocation7 + $0x110] sm:$0xff]
    %v379 = vld [vmem:[#allocation7 + $0x118] sm:$0xff]
    %v380 = vld [vmem:[#allocation7 + $0x120] sm:$0xff]
    %v381 = vld [vmem:[#allocation7 + $0x128] sm:$0xff]
    %v382 = vld [vmem:[#allocation7 + $0x130] sm:$0xff]
    %v383 = vld [vmem:[#allocation7 + $0x138] sm:$0xff]
    %v384 = vld [vmem:[#allocation7 + $0x140] sm:$0xff]
    %v385 = vld [vmem:[#allocation7 + $0x148] sm:$0xff]
    %v386 = vld [vmem:[#allocation7 + $0x150] sm:$0xff]
    %v387 = vld [vmem:[#allocation7 + $0x158] sm:$0xff]
    %v388 = vld [vmem:[#allocation7 + $0x160] sm:$0xff]
    %v389 = vld [vmem:[#allocation7 + $0x168] sm:$0xff]
    %v390 = vld [vmem:[#allocation7 + $0x170] sm:$0xff]
    %v391 = vld [vmem:[#allocation7 + $0x178] sm:$0xff]
    %v392 = vld [vmem:[#allocation7 + $0x180] sm:$0xff]
    %v393 = vld [vmem:[#allocation7 + $0x188] sm:$0xff]
    %v394 = vld [vmem:[#allocation7 + $0x190] sm:$0xff]
    %v395 = vld [vmem:[#allocation7 + $0x198] sm:$0xff]
    %v396 = vld [vmem:[#allocation7 + $0x1a0] sm:$0xff]
    %v397 = vld [vmem:[#allocation7 + $0x1a8] sm:$0xff]
    %v398 = vld [vmem:[#allocation7 + $0x1b0] sm:$0xff]
    %v399 = vld [vmem:[#allocation7 + $0x1b8] sm:$0xff]
    %v400 = vld [vmem:[#allocation7 + $0x1c0] sm:$0xff]
    %v401 = vld [vmem:[#allocation7 + $0x1c8] sm:$0xff]
    %v402 = vld [vmem:[#allocation7 + $0x1d0] sm:$0xff]
    %v403 = vld [vmem:[#allocation7 + $0x1d8] sm:$0xff]
    %v404 = vld [vmem:[#allocation7 + $0x1e0] sm:$0xff]
    %v405 = vld [vmem:[#allocation7 + $0x1e8] sm:$0xff]
    %v406 = vld [vmem:[#allocation7 + $0x1f0] sm:$0xff]
    %v407 = vld [vmem:[#allocation7 + $0x1f8] sm:$0xff]
    %v408 = vld [vmem:[%s4] sm:$0x1]
    %v410 = vlaneseq
    %v411 = vshrl.u32 %v410, 7
    %v412 = vsub.s32 0, %v411
    %v413 = vrot.slane %v408, %v412
    %415 = vmatprep.subr.mxu0 0.0
    %416 = vmatpush1.msra.mxu0 %v344
    %417 = vmatprep.subr.mxu0 0.0
    %418 = vmatpush1.msra.mxu0 %v345
    %419 = vmatprep.subr.mxu0 0.0
    %420 = vmatpush1.msra.mxu0 %v346
    %421 = vmatprep.subr.mxu0 0.0
    %422 = vmatpush1.msra.mxu0 %v347
    %423 = vmatprep.subr.mxu0 0.0
    %424 = vmatpush1.msra.mxu0 %v348
    %425 = vmatprep.subr.mxu0 0.0
    %426 = vmatpush1.msra.mxu0 %v349
    %427 = vmatprep.subr.mxu0 0.0
    %428 = vmatpush1.msra.mxu0 %v350
    %429 = vmatprep.subr.mxu0 0.0
    %430 = vmatpush1.msra.mxu0 %v351
    %431 = vmatprep.subr.mxu0 0.0
    %432 = vmatpush1.msra.mxu0 %v352
    %433 = vmatprep.subr.mxu0 0.0
    %434 = vmatpush1.msra.mxu0 %v353
    %435 = vmatprep.subr.mxu0 0.0
    %436 = vmatpush1.msra.mxu0 %v354
    %437 = vmatprep.subr.mxu0 0.0
    %438 = vmatpush1.msra.mxu0 %v355
    %439 = vmatprep.subr.mxu0 0.0
    %440 = vmatpush1.msra.mxu0 %v356
    %441 = vmatprep.subr.mxu0 0.0
    %442 = vmatpush1.msra.mxu0 %v357
    %443 = vmatprep.subr.mxu0 0.0
    %444 = vmatpush1.msra.mxu0 %v358
    %445 = vmatprep.subr.mxu0 0.0
    %446 = vmatpush1.msra.mxu0 %v359
    %447 = vmatprep.subr.mxu0 0.0
    %448 = vmatpush1.msra.mxu0 %v360
    %449 = vmatprep.subr.mxu0 0.0
    %450 = vmatpush1.msra.mxu0 %v361
    %451 = vmatprep.subr.mxu0 0.0
    %452 = vmatpush1.msra.mxu0 %v362
    %453 = vmatprep.subr.mxu0 0.0
    %454 = vmatpush1.msra.mxu0 %v363
    %455 = vmatprep.subr.mxu0 0.0
    %456 = vmatpush1.msra.mxu0 %v364
    %457 = vmatprep.subr.mxu0 0.0
    %458 = vmatpush1.msra.mxu0 %v365
    %459 = vmatprep.subr.mxu0 0.0
    %460 = vmatpush1.msra.mxu0 %v366
    %461 = vmatprep.subr.mxu0 0.0
    %462 = vmatpush1.msra.mxu0 %v367
    %463 = vmatprep.subr.mxu0 0.0
    %464 = vmatpush1.msra.mxu0 %v368
    %465 = vmatprep.subr.mxu0 0.0
    %466 = vmatpush1.msra.mxu0 %v369
    %467 = vmatprep.subr.mxu0 0.0
    %468 = vmatpush1.msra.mxu0 %v370
    %469 = vmatprep.subr.mxu0 0.0
    %470 = vmatpush1.msra.mxu0 %v371
    %471 = vmatprep.subr.mxu0 0.0
    %472 = vmatpush1.msra.mxu0 %v372
    %473 = vmatprep.subr.mxu0 0.0
    %474 = vmatpush1.msra.mxu0 %v373
    %475 = vmatprep.subr.mxu0 0.0
    %476 = vmatpush1.msra.mxu0 %v374
    %477 = vmatprep.subr.mxu0 0.0
    %478 = vmatpush1.msra.mxu0 %v375
    %479 = vmatprep.mubr.f32.mxu0 %v337
    %480 = vmatmul.mubr.f32.gmra.mrb[0].mxu0 %v336
    %v481 = vpop.f32.mrb[0].mxu0
    %v482 = vadd.f32 %v413, %v481
    %v483 = vpop.f32.mrb[0].mxu0
    %484 = vmatprep.mubr.f32.mxu0 %v341
    %485 = vmatmul.mubr.f32.gmra.mrb[0].mxu0 %v340
    %v486 = vpop.f32.mrb[0].mxu0
    %v487 = vadd.f32 %v413, %v486
    %v488 = vpop.f32.mrb[0].mxu0
    %489 = vdwg.mxu0
    %490 = vmatprep.subr.mxu0 0.0
    %491 = vmatpush1.msra.mxu0 %v376
    %492 = vmatprep.subr.mxu0 0.0
    %493 = vmatpush1.msra.mxu0 %v377
    %494 = vmatprep.subr.mxu0 0.0
    %495 = vmatpush1.msra.mxu0 %v378
    %496 = vmatprep.subr.mxu0 0.0
    %497 = vmatpush1.msra.mxu0 %v379
    %498 = vmatprep.subr.mxu0 0.0
    %499 = vmatpush1.msra.mxu0 %v380
    %500 = vmatprep.subr.mxu0 0.0
    %501 = vmatpush1.msra.mxu0 %v381
    %502 = vmatprep.subr.mxu0 0.0
    %503 = vmatpush1.msra.mxu0 %v382
    %504 = vmatprep.subr.mxu0 0.0
    %505 = vmatpush1.msra.mxu0 %v383
    %506 = vmatprep.subr.mxu0 0.0
    %507 = vmatpush1.msra.mxu0 %v384
    %508 = vmatprep.subr.mxu0 0.0
    %509 = vmatpush1.msra.mxu0 %v385
    %510 = vmatprep.subr.mxu0 0.0
    %511 = vmatpush1.msra.mxu0 %v386
    %512 = vmatprep.subr.mxu0 0.0
    %513 = vmatpush1.msra.mxu0 %v387
    %514 = vmatprep.subr.mxu0 0.0
    %515 = vmatpush1.msra.mxu0 %v388
    %516 = vmatprep.subr.mxu0 0.0
    %517 = vmatpush1.msra.mxu0 %v389
    %518 = vmatprep.subr.mxu0 0.0
    %519 = vmatpush1.msra.mxu0 %v390
    %520 = vmatprep.subr.mxu0 0.0
    %521 = vmatpush1.msra.mxu0 %v391
    %522 = vmatprep.subr.mxu0 0.0
    %523 = vmatpush1.msra.mxu0 %v392
    %524 = vmatprep.subr.mxu0 0.0
    %525 = vmatpush1.msra.mxu0 %v393
    %526 = vmatprep.subr.mxu0 0.0
    %527 = vmatpush1.msra.mxu0 %v394
    %528 = vmatprep.subr.mxu0 0.0
    %529 = vmatpush1.msra.mxu0 %v395
    %530 = vmatprep.subr.mxu0 0.0
    %531 = vmatpush1.msra.mxu0 %v396
    %532 = vmatprep.subr.mxu0 0.0
    %533 = vmatpush1.msra.mxu0 %v397
    %534 = vmatprep.subr.mxu0 0.0
    %535 = vmatpush1.msra.mxu0 %v398
    %536 = vmatprep.subr.mxu0 0.0
    %537 = vmatpush1.msra.mxu0 %v399
    %538 = vmatprep.subr.mxu0 0.0
    %539 = vmatpush1.msra.mxu0 %v400
    %540 = vmatprep.subr.mxu0 0.0
    %541 = vmatpush1.msra.mxu0 %v401
    %542 = vmatprep.subr.mxu0 0.0
    %543 = vmatpush1.msra.mxu0 %v402
    %544 = vmatprep.subr.mxu0 0.0
    %545 = vmatpush1.msra.mxu0 %v403
    %546 = vmatprep.subr.mxu0 0.0
    %547 = vmatpush1.msra.mxu0 %v404
    %548 = vmatprep.subr.mxu0 0.0
    %549 = vmatpush1.msra.mxu0 %v405
    %550 = vmatprep.subr.mxu0 0.0
    %551 = vmatpush1.msra.mxu0 %v406
    %552 = vmatprep.subr.mxu0 0.0
    %553 = vmatpush1.msra.mxu0 %v407
    %554 = vmatprep.mubr.f32.mxu0 %v339
    %555 = vmatmul.mubr.f32.gmra.mrb[0].mxu0 %v338
    %v556 = vpop.f32.mrb[0].mxu0
    %v557 = vadd.f32 %v482, %v556
    %v558 = vpop.f32.mrb[0].mxu0
    %559 = vmatprep.mubr.f32.mxu0 %v343
    %560 = vmatmul.mubr.f32.gmra.mrb[0].mxu0 %v342
    %v561 = vpop.f32.mrb[0].mxu0
    %v562 = vadd.f32 %v487, %v561
    %v563 = vpop.f32.mrb[0].mxu0
    %564 = vdwg.mxu0
    %565 = vst [vmem:[#allocation8] sm:$0xff] %v557
    %566 = vst [vmem:[#allocation8 + $0x8] sm:$0xff] %v562
    // Predicated region
    $region34: #{tpu_custom_call.1} parent=1 // pred_check
      _
    $region35: #{tpu_custom_call.1} parent=1 // pred_check_branch
      %568 = sbr.rel (0) target = $region37
    $region36: #{tpu_custom_call.1} parent=1 // pred_region
      %s570 = ssub.s32 256, 256
      %571 = vsyncadd [#allocation4], %s570
      %s572 = sshll.u32 [#allocation8], 4
      %s573 = int_to_ptr.vmem [resolvable:$true] %s572
      %578 = dma.vmem_to_hbm [thread:$0]  %s573, 256, %s5, [#allocation4], 128, 128, 8
    $region37: #{tpu_custom_call.1} parent=1 // pred_fallthru
      _
    // Predicated region
    $region38: #{tpu_custom_call.1} parent=1 // pred_check
      _
    $region39: #{tpu_custom_call.1} parent=1 // pred_check_branch
      %580 = sbr.rel (0) target = $region41
    $region40: #{tpu_custom_call.1} parent=1 // pred_region
      %581 = dma.done [#allocation4], 256
    $region41: #{tpu_custom_call.1} parent=1 // pred_fallthru
      _
    %582 = vsyncpa [#allocation3], 1
    %583 = vsyncpa [#allocation6], 1
    %584 = vsyncpa [#allocation4], 1

// kernel: tpu_custom_call.1
$region0: #{tpu_custom_call.1}
  #allocation0 [shape = 'u32[]', space=smem, size = 0x4, offset = 0x4, fixed_abs, tag = 'smem constant byte address 0x4 - core index']
  #allocation1 [shape = 'u32[144,128]{1,0:T(1,128)}', space=vmem, size = 0x12000, scoped, tag = 'internal scratch']
  %s0 = inlined_call_operand.hbm [shape: f32[16,128], index: 0, kind: input, shape index: {}]
  %s1 = inlined_call_operand.hbm [shape: f32[128,512], index: 1, kind: input, shape index: {}]
  %s2 = inlined_call_operand.vmem [shape: f32[1,512], index: 2, kind: input, shape index: {}]
  %s3 = inlined_call_operand.hbm [shape: f32[512,128], index: 3, kind: input, shape index: {}]
  %s4 = inlined_call_operand.vmem [shape: f32[1,128], index: 4, kind: input, shape index: {}]
  %s5 = inlined_call_operand.hbm [shape: f32[16,128], index: 5, kind: output, shape index: {}]
  %s6 = sld [smem:[#allocation0]]
  $region42: #{tpu_custom_call.1} parent=0
    _
  %s8 = ssub.s32 1, %s6
  %s9 = scalar_select 0, %s8, %s6
  $region1: #{tpu_custom_call.1} parent=0
    #allocation2 [shape = 'u8[8192]{0}', space=vmem, size = 0x2000, scoped, tag = 'input window, operand 0, single buffered']
    #allocation3 [shape = 's32[1]{0}', space=sflag, size = 0x4, scoped, tag = 'scoped memory for tpu_custom_call.1']
    #allocation4 [shape = 's32[1]{0}', space=sflag, size = 0x4, scoped, tag = 'scoped memory for tpu_custom_call.1']
    #allocation5 [shape = 'u8[262144]{0}', space=vmem, size = 0x40000, scoped, tag = 'input window, operand 1, single buffered']
    #allocation6 [shape = 's32[1]{0}', space=sflag, size = 0x4, scoped, tag = 'scoped memory for tpu_custom_call.1']
    #allocation7 [shape = 'u8[262144]{0}', space=vmem, size = 0x40000, scoped, tag = 'input window, operand 3, single buffered']
    #allocation8 [shape = 'u8[8192]{0}', space=vmem, size = 0x2000, scoped, tag = 'output window, operand 0, single buffered']
    %10 = vsyncpa [#allocation3], 0
    %11 = vsyncpa [#allocation6], 0
    %12 = vsyncpa [#allocation4], 0
    // Predicated region
    $region2: #{tpu_custom_call.1} parent=1 // pred_check
      _
    $region3: #{tpu_custom_call.1} parent=1 // pred_check_branch
      %14 = sbr.rel (0) target = $region5
    $region4: #{tpu_custom_call.1} parent=1 // pred_region
      %s16 = ssub.s32 256, 256
      %17 = vsyncadd [#allocation3], %s16
      %s18 = sshll.u32 [#allocation2], 4
      %s19 = int_to_ptr.vmem [resolvable:$true] %s18
      %24 = dma.hbm_to_vmem [thread:$0]  %s0, 256, %s19, [#allocation3], 128, 128, 8
    $region5: #{tpu_custom_call.1} parent=1 // pred_fallthru
      _
    // Predicated region
    $region6: #{tpu_custom_call.1} parent=1 // pred_check
      _
    $region7: #{tpu_custom_call.1} parent=1 // pred_check_branch
      %26 = sbr.rel (0) target = $region9
    $region8: #{tpu_custom_call.1} parent=1 // pred_region
      %s28 = ssub.s32 8192, 8192
      %29 = vsyncadd [#allocation6], %s28
      %s30 = sshll.u32 [#allocation5], 4
      %s31 = int_to_ptr.vmem [resolvable:$true] %s30
      %36 = dma.hbm_to_vmem [thread:$0]  %s1, 8192, %s31, [#allocation6], 512, 512, 32
    $region9: #{tpu_custom_call.1} parent=1 // pred_fallthru
      _
    // Predicated region
    $region10: #{tpu_custom_call.1} parent=1 // pred_check
      _
    $region11: #{tpu_custom_call.1} parent=1 // pred_check_branch
      %38 = sbr.rel (0) target = $region13
    $region12: #{tpu_custom_call.1} parent=1 // pred_region
      _
    $region13: #{tpu_custom_call.1} parent=1 // pred_fallthru
      _
    // Predicated region
    $region14: #{tpu_custom_call.1} parent=1 // pred_check
      _
    $region15: #{tpu_custom_call.1} parent=1 // pred_check_branch
      %40 = sbr.rel (0) target = $region17
    $region16: #{tpu_custom_call.1} parent=1 // pred_region
      %s42 = ssub.s32 8192, 8192
      %43 = vsyncadd [#allocation6], %s42
      %s44 = sshll.u32 [#allocation7], 4
      %s45 = int_to_ptr.vmem [resolvable:$true] %s44
      %50 = dma.hbm_to_vmem [thread:$0]  %s3, 8192, %s45, [#allocation6], 128, 128, 8
    $region17: #{tpu_custom_call.1} parent=1 // pred_fallthru
      _
    // Predicated region
    $region18: #{tpu_custom_call.1} parent=1 // pred_check
      _
    $region19: #{tpu_custom_call.1} parent=1 // pred_check_branch
      %52 = sbr.rel (0) target = $region21
    $region20: #{tpu_custom_call.1} parent=1 // pred_region
      _
    $region21: #{tpu_custom_call.1} parent=1 // pred_fallthru
      _
    // Predicated region
    $region22: #{tpu_custom_call.1} parent=1 // pred_check
      _
    $region23: #{tpu_custom_call.1} parent=1 // pred_check_branch
      %54 = sbr.rel (0) target = $region25
    $region24: #{tpu_custom_call.1} parent=1 // pred_region
      %55 = dma.done [#allocation3], 256
    $region25: #{tpu_custom_call.1} parent=1 // pred_fallthru
      _
    // Predicated region
    $region26: #{tpu_custom_call.1} parent=1 // pred_check
      _
    $region27: #{tpu_custom_call.1} parent=1 // pred_check_branch
      %57 = sbr.rel (0) target = $region29
    $region28: #{tpu_custom_call.1} parent=1 // pred_region
      %58 = dma.done [#allocation6], 8192
    $region29: #{tpu_custom_call.1} parent=1 // pred_fallthru
      _
    // Predicated region
    $region30: #{tpu_custom_call.1} parent=1 // pred_check
      _
    $region31: #{tpu_custom_call.1} parent=1 // pred_check_branch
      %60 = sbr.rel (0) target = $region33
    $region32: #{tpu_custom_call.1} parent=1 // pred_region
      %61 = dma.done [#allocation6], 8192
    $region33: #{tpu_custom_call.1} parent=1 // pred_fallthru
      _
    %v62 = vld [vmem:[#allocation2] sm:$0xff]
    %v63 = vld [vmem:[#allocation2 + $0x8] sm:$0xff]
    %v64 = vld [vmem:[#allocation5] sm:$0xff]
    %v65 = vld [vmem:[#allocation5 + $0x8] sm:$0xff]
    %v66 = vld [vmem:[#allocation5 + $0x10] sm:$0xff]
    %v67 = vld [vmem:[#allocation5 + $0x18] sm:$0xff]
    %v68 = vld [vmem:[#allocation5 + $0x20] sm:$0xff]
    %v69 = vld [vmem:[#allocation5 + $0x28] sm:$0xff]
    %v70 = vld [vmem:[#allocation5 + $0x30] sm:$0xff]
    %v71 = vld [vmem:[#allocation5 + $0x38] sm:$0xff]
    %v72 = vld [vmem:[#allocation5 + $0x40] sm:$0xff]
    %v73 = vld [vmem:[#allocation5 + $0x48] sm:$0xff]
    %v74 = vld [vmem:[#allocation5 + $0x50] sm:$0xff]
    %v75 = vld [vmem:[#allocation5 + $0x58] sm:$0xff]
    %v76 = vld [vmem:[#allocation5 + $0x60] sm:$0xff]
    %v77 = vld [vmem:[#allocation5 + $0x68] sm:$0xff]
    %v78 = vld [vmem:[#allocation5 + $0x70] sm:$0xff]
    %v79 = vld [vmem:[#allocation5 + $0x78] sm:$0xff]
    %v80 = vld [vmem:[#allocation5 + $0x80] sm:$0xff]
    %v81 = vld [vmem:[#allocation5 + $0x88] sm:$0xff]
    %v82 = vld [vmem:[#allocation5 + $0x90] sm:$0xff]
    %v83 = vld [vmem:[#allocation5 + $0x98] sm:$0xff]
    %v84 = vld [vmem:[#allocation5 + $0xa0] sm:$0xff]
    %v85 = vld [vmem:[#allocation5 + $0xa8] sm:$0xff]
    %v86 = vld [vmem:[#allocation5 + $0xb0] sm:$0xff]
    %v87 = vld [vmem:[#allocation5 + $0xb8] sm:$0xff]
    %v88 = vld [vmem:[#allocation5 + $0xc0] sm:$0xff]
    %v89 = vld [vmem:[#allocation5 + $0xc8] sm:$0xff]
    %v90 = vld [vmem:[#allocation5 + $0xd0] sm:$0xff]
    %v91 = vld [vmem:[#allocation5 + $0xd8] sm:$0xff]
    %v92 = vld [vmem:[#allocation5 + $0xe0] sm:$0xff]
    %v93 = vld [vmem:[#allocation5 + $0xe8] sm:$0xff]
    %v94 = vld [vmem:[#allocation5 + $0xf0] sm:$0xff]
    %v95 = vld [vmem:[#allocation5 + $0xf8] sm:$0xff]
    %v96 = vld [vmem:[#allocation5 + $0x100] sm:$0xff]
    %v97 = vld [vmem:[#allocation5 + $0x108] sm:$0xff]
    %v98 = vld [vmem:[#allocation5 + $0x110] sm:$0xff]
    %v99 = vld [vmem:[#allocation5 + $0x118] sm:$0xff]
    %v100 = vld [vmem:[#allocation5 + $0x120] sm:$0xff]
    %v101 = vld [vmem:[#allocation5 + $0x128] sm:$0xff]
    %v102 = vld [vmem:[#allocation5 + $0x130] sm:$0xff]
    %v103 = vld [vmem:[#allocation5 + $0x138] sm:$0xff]
    %v104 = vld [vmem:[#allocation5 + $0x140] sm:$0xff]
    %v105 = vld [vmem:[#allocation5 + $0x148] sm:$0xff]
    %v106 = vld [vmem:[#allocation5 + $0x150] sm:$0xff]
    %v107 = vld [vmem:[#allocation5 + $0x158] sm:$0xff]
    %v108 = vld [vmem:[#allocation5 + $0x160] sm:$0xff]
    %v109 = vld [vmem:[#allocation5 + $0x168] sm:$0xff]
    %v110 = vld [vmem:[#allocation5 + $0x170] sm:$0xff]
    %v111 = vld [vmem:[#allocation5 + $0x178] sm:$0xff]
    %v112 = vld [vmem:[#allocation5 + $0x180] sm:$0xff]
    %v113 = vld [vmem:[#allocation5 + $0x188] sm:$0xff]
    %v114 = vld [vmem:[#allocation5 + $0x190] sm:$0xff]
    %v115 = vld [vmem:[#allocation5 + $0x198] sm:$0xff]
    %v116 = vld [vmem:[#allocation5 + $0x1a0] sm:$0xff]
    %v117 = vld [vmem:[#allocation5 + $0x1a8] sm:$0xff]
    %v118 = vld [vmem:[#allocation5 + $0x1b0] sm:$0xff]
    %v119 = vld [vmem:[#allocation5 + $0x1b8] sm:$0xff]
    %v120 = vld [vmem:[#allocation5 + $0x1c0] sm:$0xff]
    %v121 = vld [vmem:[#allocation5 + $0x1c8] sm:$0xff]
    %v122 = vld [vmem:[#allocation5 + $0x1d0] sm:$0xff]
    %v123 = vld [vmem:[#allocation5 + $0x1d8] sm:$0xff]
    %v124 = vld [vmem:[#allocation5 + $0x1e0] sm:$0xff]
    %v125 = vld [vmem:[#allocation5 + $0x1e8] sm:$0xff]
    %v126 = vld [vmem:[#allocation5 + $0x1f0] sm:$0xff]
    %v127 = vld [vmem:[#allocation5 + $0x1f8] sm:$0xff]
    %v128 = vld [vmem:[%s2] sm:$0xf]
    %v130 = vlaneseq
    %v131 = vshrl.u32 %v130, 7
    %v132 = vsub.s32 0, %v131
    %v133 = vrot.slane %v128, %v132
    %v134 = vlaneseq
    %v135 = vshrl.u32 %v134, 7
    %v136 = vsub.s32 1, %v135
    %v137 = vrot.slane %v128, %v136
    %v138 = vlaneseq
    %v139 = vshrl.u32 %v138, 7
    %v140 = vsub.s32 2, %v139
    %v141 = vrot.slane %v128, %v140
    %v142 = vlaneseq
    %v143 = vshrl.u32 %v142, 7
    %v144 = vsub.s32 3, %v143
    %v145 = vrot.slane %v128, %v144
    %150 = vmatprep.subr.mxu0 %v65
    %151 = vmatpush1.msra.mxu0 %v64
    %152 = vmatprep.subr.mxu0 %v69
    %153 = vmatpush1.msra.mxu0 %v68
    %154 = vmatprep.subr.mxu0 %v73
    %155 = vmatpush1.msra.mxu0 %v72
    %156 = vmatprep.subr.mxu0 %v77
    %157 = vmatpush1.msra.mxu0 %v76
    %158 = vmatprep.subr.mxu0 %v81
    %159 = vmatpush1.msra.mxu0 %v80
    %160 = vmatprep.subr.mxu0 %v85
    %161 = vmatpush1.msra.mxu0 %v84
    %162 = vmatprep.subr.mxu0 %v89
    %163 = vmatpush1.msra.mxu0 %v88
    %164 = vmatprep.subr.mxu0 %v93
    %165 = vmatpush1.msra.mxu0 %v92
    %166 = vmatprep.subr.mxu0 %v97
    %167 = vmatpush1.msra.mxu0 %v96
    %168 = vmatprep.subr.mxu0 %v101
    %169 = vmatpush1.msra.mxu0 %v100
    %170 = vmatprep.subr.mxu0 %v105
    %171 = vmatpush1.msra.mxu0 %v104
    %172 = vmatprep.subr.mxu0 %v109
    %173 = vmatpush1.msra.mxu0 %v108
    %174 = vmatprep.subr.mxu0 %v113
    %175 = vmatpush1.msra.mxu0 %v112
    %176 = vmatprep.subr.mxu0 %v117
    %177 = vmatpush1.msra.mxu0 %v116
    %178 = vmatprep.subr.mxu0 %v121
    %179 = vmatpush1.msra.mxu0 %v120
    %180 = vmatprep.subr.mxu0 %v125
    %181 = vmatpush1.msra.mxu0 %v124
    %182 = vmatprep.subr.mxu0 0.0
    %183 = vmatpush1.msra.mxu0 0.0
    %184 = vmatprep.subr.mxu0 0.0
    %185 = vmatpush1.msra.mxu0 0.0
    %186 = vmatprep.subr.mxu0 0.0
    %187 = vmatpush1.msra.mxu0 0.0
    %188 = vmatprep.subr.mxu0 0.0
    %189 = vmatpush1.msra.mxu0 0.0
    %190 = vmatprep.subr.mxu0 0.0
    %191 = vmatpush1.msra.mxu0 0.0
    %192 = vmatprep.subr.mxu0 0.0
    %193 = vmatpush1.msra.mxu0 0.0
    %194 = vmatprep.subr.mxu0 0.0
    %195 = vmatpush1.msra.mxu0 0.0
    %196 = vmatprep.subr.mxu0 0.0
    %197 = vmatpush1.msra.mxu0 0.0
    %198 = vmatprep.subr.mxu0 0.0
    %199 = vmatpush1.msra.mxu0 0.0
    %200 = vmatprep.subr.mxu0 0.0
    %201 = vmatpush1.msra.mxu0 0.0
    %202 = vmatprep.subr.mxu0 0.0
    %203 = vmatpush1.msra.mxu0 0.0
    %204 = vmatprep.subr.mxu0 0.0
    %205 = vmatpush1.msra.mxu0 0.0
    %206 = vmatprep.subr.mxu0 0.0
    %207 = vmatpush1.msra.mxu0 0.0
    %208 = vmatprep.subr.mxu0 0.0
    %209 = vmatpush1.msra.mxu0 0.0
    %210 = vmatprep.subr.mxu0 0.0
    %211 = vmatpush1.msra.mxu0 0.0
    %212 = vmatprep.subr.mxu0 0.0
    %213 = vmatpush1.msra.mxu0 0.0
    %214 = vmatprep.mubr.f32.mxu0 0.0
    %215 = vmatmul.mubr.f32.gmra.mrb[0].mxu0 %v62
    %v216 = vpop.f32.mrb[0].mxu0
    %v217 = vadd.f32 %v133, %v216
    %v218 = vpop.f32.mrb[0].mxu0
    %v219 = vadd.f32 %v137, %v218
    %220 = vmatprep.mubr.f32.mxu0 0.0
    %221 = vmatmul.mubr.f32.gmra.mrb[0].mxu0 %v63
    %v222 = vpop.f32.mrb[0].mxu0
    %v223 = vadd.f32 %v133, %v222
    %v224 = vpop.f32.mrb[0].mxu0
    %v225 = vadd.f32 %v137, %v224
    %226 = vdwg.mxu0
    %227 = vmatprep.subr.mxu0 %v67
    %228 = vmatpush1.msra.mxu0 %v66
    %229 = vmatprep.subr.mxu0 %v71
    %230 = vmatpush1.msra.mxu0 %v70
    %231 = vmatprep.subr.mxu0 %v75
    %232 = vmatpush1.msra.mxu0 %v74
    %233 = vmatprep.subr.mxu0 %v79
    %234 = vmatpush1.msra.mxu0 %v78
    %235 = vmatprep.subr.mxu0 %v83
    %236 = vmatpush1.msra.mxu0 %v82
    %237 = vmatprep.subr.mxu0 %v87
    %238 = vmatpush1.msra.mxu0 %v86
    %239 = vmatprep.subr.mxu0 %v91
    %240 = vmatpush1.msra.mxu0 %v90
    %241 = vmatprep.subr.mxu0 %v95
    %242 = vmatpush1.msra.mxu0 %v94
    %243 = vmatprep.subr.mxu0 %v99
    %244 = vmatpush1.msra.mxu0 %v98
    %245 = vmatprep.subr.mxu0 %v103
    %246 = vmatpush1.msra.mxu0 %v102
    %247 = vmatprep.subr.mxu0 %v107
    %248 = vmatpush1.msra.mxu0 %v106
    %249 = vmatprep.subr.mxu0 %v111
    %250 = vmatpush1.msra.mxu0 %v110
    %251 = vmatprep.subr.mxu0 %v115
    %252 = vmatpush1.msra.mxu0 %v114
    %253 = vmatprep.subr.mxu0 %v119
    %254 = vmatpush1.msra.mxu0 %v118
    %255 = vmatprep.subr.mxu0 %v123
    %256 = vmatpush1.msra.mxu0 %v122
    %257 = vmatprep.subr.mxu0 %v127
    %258 = vmatpush1.msra.mxu0 %v126
    %259 = vmatprep.subr.mxu0 0.0
    %260 = vmatpush1.msra.mxu0 0.0
    %261 = vmatprep.subr.mxu0 0.0
    %262 = vmatpush1.msra.mxu0 0.0
    %263 = vmatprep.subr.mxu0 0.0
    %264 = vmatpush1.msra.mxu0 0.0
    %265 = vmatprep.subr.mxu0 0.0
    %266 = vmatpush1.msra.mxu0 0.0
    %267 = vmatprep.subr.mxu0 0.0
    %268 = vmatpush1.msra.mxu0 0.0
    %269 = vmatprep.subr.mxu0 0.0
    %270 = vmatpush1.msra.mxu0 0.0
    %271 = vmatprep.subr.mxu0 0.0
    %272 = vmatpush1.msra.mxu0 0.0
    %273 = vmatprep.subr.mxu0 0.0
    %274 = vmatpush1.msra.mxu0 0.0
    %275 = vmatprep.subr.mxu0 0.0
    %276 = vmatpush1.msra.mxu0 0.0
    %277 = vmatprep.subr.mxu0 0.0
    %278 = vmatpush1.msra.mxu0 0.0
    %279 = vmatprep.subr.mxu0 0.0
    %280 = vmatpush1.msra.mxu0 0.0
    %281 = vmatprep.subr.mxu0 0.0
    %282 = vmatpush1.msra.mxu0 0.0
    %283 = vmatprep.subr.mxu0 0.0
    %284 = vmatpush1.msra.mxu0 0.0
    %285 = vmatprep.subr.mxu0 0.0
    %286 = vmatpush1.msra.mxu0 0.0
    %287 = vmatprep.subr.mxu0 0.0
    %288 = vmatpush1.msra.mxu0 0.0
    %289 = vmatprep.subr.mxu0 0.0
    %290 = vmatpush1.msra.mxu0 0.0
    %291 = vmatprep.mubr.f32.mxu0 0.0
    %292 = vmatmul.mubr.f32.gmra.mrb[0].mxu0 %v62
    %v293 = vpop.f32.mrb[0].mxu0
    %v294 = vadd.f32 %v141, %v293
    %v295 = vpop.f32.mrb[0].mxu0
    %v296 = vadd.f32 %v145, %v295
    %297 = vmatprep.mubr.f32.mxu0 0.0
    %298 = vmatmul.mubr.f32.gmra.mrb[0].mxu0 %v63
    %v299 = vpop.f32.mrb[0].mxu0
    %v300 = vadd.f32 %v141, %v299
    %v301 = vpop.f32.mrb[0].mxu0
    %v302 = vadd.f32 %v145, %v301
    %303 = vdwg.mxu0
    %v304 = vmul.f32 %v217, 0.5
    %v305 = vmul.f32 %v219, 0.5
    %v306 = vmul.f32 %v294, 0.5
    %v307 = vmul.f32 %v296, 0.5
    %v308 = vmul.f32 %v223, 0.5
    %v309 = vmul.f32 %v225, 0.5
    %v310 = vmul.f32 %v300, 0.5
    %v311 = vmul.f32 %v302, 0.5
    %v312 = vmul.f32 %v217, 0.70710677
    %v313 = vmul.f32 %v219, 0.70710677
    %v314 = vmul.f32 %v294, 0.70710677
    %v315 = vmul.f32 %v296, 0.70710677
    %v316 = vmul.f32 %v223, 0.70710677
    %v317 = vmul.f32 %v225, 0.70710677
    %v318 = vmul.f32 %v300, 0.70710677
    %v319 = vmul.f32 %v302, 0.70710677
    %v320 = verf.f32.pop %v312
    %v321 = verf.f32.pop %v313
    %v322 = verf.f32.pop %v314
    %v323 = verf.f32.pop %v315
    %v324 = verf.f32.pop %v316
    %v325 = verf.f32.pop %v317
    %v326 = verf.f32.pop %v318
    %v327 = verf.f32.pop %v319
    %v328 = vadd.f32 %v320, 1.0
    %v329 = vadd.f32 %v321, 1.0
    %v330 = vadd.f32 %v322, 1.0
    %v331 = vadd.f32 %v323, 1.0
    %v332 = vadd.f32 %v324, 1.0
    %v333 = vadd.f32 %v325, 1.0
    %v334 = vadd.f32 %v326, 1.0
    %v335 = vadd.f32 %v327, 1.0
    %v336 = vmul.f32 %v304, %v328
    %v337 = vmul.f32 %v305, %v329
    %v338 = vmul.f32 %v306, %v330
    %v339 = vmul.f32 %v307, %v331
    %v340 = vmul.f32 %v308, %v332
    %v341 = vmul.f32 %v309, %v333
    %v342 = vmul.f32 %v310, %v334
    %v343 = vmul.f32 %v311, %v335
    %v344 = vld [vmem:[#allocation7] sm:$0xff]
    %v345 = vld [vmem:[#allocation7 + $0x8] sm:$0xff]
    %v346 = vld [vmem:[#allocation7 + $0x10] sm:$0xff]
    %v347 = vld [vmem:[#allocation7 + $0x18] sm:$0xff]
    %v348 = vld [vmem:[#allocation7 + $0x20] sm:$0xff]
    %v349 = vld [vmem:[#allocation7 + $0x28] sm:$0xff]
    %v350 = vld [vmem:[#allocation7 + $0x30] sm:$0xff]
    %v351 = vld [vmem:[#allocation7 + $0x38] sm:$0xff]
    %v352 = vld [vmem:[#allocation7 + $0x40] sm:$0xff]
    %v353 = vld [vmem:[#allocation7 + $0x48] sm:$0xff]
    %v354 = vld [vmem:[#allocation7 + $0x50] sm:$0xff]
    %v355 = vld [vmem:[#allocation7 + $0x58] sm:$0xff]
    %v356 = vld [vmem:[#allocation7 + $0x60] sm:$0xff]
    %v357 = vld [vmem:[#allocation7 + $0x68] sm:$0xff]
    %v358 = vld [vmem:[#allocation7 + $0x70] sm:$0xff]
    %v359 = vld [vmem:[#allocation7 + $0x78] sm:$0xff]
    %v360 = vld [vmem:[#allocation7 + $0x80] sm:$0xff]
    %v361 = vld [vmem:[#allocation7 + $0x88] sm:$0xff]
    %v362 = vld [vmem:[#allocation7 + $0x90] sm:$0xff]
    %v363 = vld [vmem:[#allocation7 + $0x98] sm:$0xff]
    %v364 = vld [vmem:[#allocation7 + $0xa0] sm:$0xff]
    %v365 = vld [vmem:[#allocation7 + $0xa8] sm:$0xff]
    %v366 = vld [vmem:[#allocation7 + $0xb0] sm:$0xff]
    %v367 = vld [vmem:[#allocation7 + $0xb8] sm:$0xff]
    %v368 = vld [vmem:[#allocation7 + $0xc0] sm:$0xff]
    %v369 = vld [vmem:[#allocation7 + $0xc8] sm:$0xff]
    %v370 = vld [vmem:[#allocation7 + $0xd0] sm:$0xff]
    %v371 = vld [vmem:[#allocation7 + $0xd8] sm:$0xff]
    %v372 = vld [vmem:[#allocation7 + $0xe0] sm:$0xff]
    %v373 = vld [vmem:[#allocation7 + $0xe8] sm:$0xff]
    %v374 = vld [vmem:[#allocation7 + $0xf0] sm:$0xff]
    %v375 = vld [vmem:[#allocation7 + $0xf8] sm:$0xff]
    %v376 = vld [vmem:[#allocation7 + $0x100] sm:$0xff]
    %v377 = vld [vmem:[#allocation7 + $0x108] sm:$0xff]
    %v378 = vld [vmem:[#allocation7 + $0x110] sm:$0xff]
    %v379 = vld [vmem:[#allocation7 + $0x118] sm:$0xff]
    %v380 = vld [vmem:[#allocation7 + $0x120] sm:$0xff]
    %v381 = vld [vmem:[#allocation7 + $0x128] sm:$0xff]
    %v382 = vld [vmem:[#allocation7 + $0x130] sm:$0xff]
    %v383 = vld [vmem:[#allocation7 + $0x138] sm:$0xff]
    %v384 = vld [vmem:[#allocation7 + $0x140] sm:$0xff]
    %v385 = vld [vmem:[#allocation7 + $0x148] sm:$0xff]
    %v386 = vld [vmem:[#allocation7 + $0x150] sm:$0xff]
    %v387 = vld [vmem:[#allocation7 + $0x158] sm:$0xff]
    %v388 = vld [vmem:[#allocation7 + $0x160] sm:$0xff]
    %v389 = vld [vmem:[#allocation7 + $0x168] sm:$0xff]
    %v390 = vld [vmem:[#allocation7 + $0x170] sm:$0xff]
    %v391 = vld [vmem:[#allocation7 + $0x178] sm:$0xff]
    %v392 = vld [vmem:[#allocation7 + $0x180] sm:$0xff]
    %v393 = vld [vmem:[#allocation7 + $0x188] sm:$0xff]
    %v394 = vld [vmem:[#allocation7 + $0x190] sm:$0xff]
    %v395 = vld [vmem:[#allocation7 + $0x198] sm:$0xff]
    %v396 = vld [vmem:[#allocation7 + $0x1a0] sm:$0xff]
    %v397 = vld [vmem:[#allocation7 + $0x1a8] sm:$0xff]
    %v398 = vld [vmem:[#allocation7 + $0x1b0] sm:$0xff]
    %v399 = vld [vmem:[#allocation7 + $0x1b8] sm:$0xff]
    %v400 = vld [vmem:[#allocation7 + $0x1c0] sm:$0xff]
    %v401 = vld [vmem:[#allocation7 + $0x1c8] sm:$0xff]
    %v402 = vld [vmem:[#allocation7 + $0x1d0] sm:$0xff]
    %v403 = vld [vmem:[#allocation7 + $0x1d8] sm:$0xff]
    %v404 = vld [vmem:[#allocation7 + $0x1e0] sm:$0xff]
    %v405 = vld [vmem:[#allocation7 + $0x1e8] sm:$0xff]
    %v406 = vld [vmem:[#allocation7 + $0x1f0] sm:$0xff]
    %v407 = vld [vmem:[#allocation7 + $0x1f8] sm:$0xff]
    %v408 = vld [vmem:[%s4] sm:$0x1]
    %v410 = vlaneseq
    %v411 = vshrl.u32 %v410, 7
    %v412 = vsub.s32 0, %v411
    %v413 = vrot.slane %v408, %v412
    %415 = vmatprep.subr.mxu0 0.0
    %416 = vmatpush1.msra.mxu0 %v344
    %417 = vmatprep.subr.mxu0 0.0
    %418 = vmatpush1.msra.mxu0 %v345
    %419 = vmatprep.subr.mxu0 0.0
    %420 = vmatpush1.msra.mxu0 %v346
    %421 = vmatprep.subr.mxu0 0.0
    %422 = vmatpush1.msra.mxu0 %v347
    %423 = vmatprep.subr.mxu0 0.0
    %424 = vmatpush1.msra.mxu0 %v348
    %425 = vmatprep.subr.mxu0 0.0
    %426 = vmatpush1.msra.mxu0 %v349
    %427 = vmatprep.subr.mxu0 0.0
    %428 = vmatpush1.msra.mxu0 %v350
    %429 = vmatprep.subr.mxu0 0.0
    %430 = vmatpush1.msra.mxu0 %v351
    %431 = vmatprep.subr.mxu0 0.0
    %432 = vmatpush1.msra.mxu0 %v352
    %433 = vmatprep.subr.mxu0 0.0
    %434 = vmatpush1.msra.mxu0 %v353
    %435 = vmatprep.subr.mxu0 0.0
    %436 = vmatpush1.msra.mxu0 %v354
    %437 = vmatprep.subr.mxu0 0.0
    %438 = vmatpush1.msra.mxu0 %v355
    %439 = vmatprep.subr.mxu0 0.0
    %440 = vmatpush1.msra.mxu0 %v356
    %441 = vmatprep.subr.mxu0 0.0
    %442 = vmatpush1.msra.mxu0 %v357
    %443 = vmatprep.subr.mxu0 0.0
    %444 = vmatpush1.msra.mxu0 %v358
    %445 = vmatprep.subr.mxu0 0.0
    %446 = vmatpush1.msra.mxu0 %v359
    %447 = vmatprep.subr.mxu0 0.0
    %448 = vmatpush1.msra.mxu0 %v360
    %449 = vmatprep.subr.mxu0 0.0
    %450 = vmatpush1.msra.mxu0 %v361
    %451 = vmatprep.subr.mxu0 0.0
    %452 = vmatpush1.msra.mxu0 %v362
    %453 = vmatprep.subr.mxu0 0.0
    %454 = vmatpush1.msra.mxu0 %v363
    %455 = vmatprep.subr.mxu0 0.0
    %456 = vmatpush1.msra.mxu0 %v364
    %457 = vmatprep.subr.mxu0 0.0
    %458 = vmatpush1.msra.mxu0 %v365
    %459 = vmatprep.subr.mxu0 0.0
    %460 = vmatpush1.msra.mxu0 %v366
    %461 = vmatprep.subr.mxu0 0.0
    %462 = vmatpush1.msra.mxu0 %v367
    %463 = vmatprep.subr.mxu0 0.0
    %464 = vmatpush1.msra.mxu0 %v368
    %465 = vmatprep.subr.mxu0 0.0
    %466 = vmatpush1.msra.mxu0 %v369
    %467 = vmatprep.subr.mxu0 0.0
    %468 = vmatpush1.msra.mxu0 %v370
    %469 = vmatprep.subr.mxu0 0.0
    %470 = vmatpush1.msra.mxu0 %v371
    %471 = vmatprep.subr.mxu0 0.0
    %472 = vmatpush1.msra.mxu0 %v372
    %473 = vmatprep.subr.mxu0 0.0
    %474 = vmatpush1.msra.mxu0 %v373
    %475 = vmatprep.subr.mxu0 0.0
    %476 = vmatpush1.msra.mxu0 %v374
    %477 = vmatprep.subr.mxu0 0.0
    %478 = vmatpush1.msra.mxu0 %v375
    %479 = vmatprep.mubr.f32.mxu0 %v337
    %480 = vmatmul.mubr.f32.gmra.mrb[0].mxu0 %v336
    %v481 = vpop.f32.mrb[0].mxu0
    %v482 = vadd.f32 %v413, %v481
    %v483 = vpop.f32.mrb[0].mxu0
    %484 = vmatprep.mubr.f32.mxu0 %v341
    %485 = vmatmul.mubr.f32.gmra.mrb[0].mxu0 %v340
    %v486 = vpop.f32.mrb[0].mxu0
    %v487 = vadd.f32 %v413, %v486
    %v488 = vpop.f32.mrb[0].mxu0
    %489 = vdwg.mxu0
    %490 = vmatprep.subr.mxu0 0.0
    %491 = vmatpush1.msra.mxu0 %v376
    %492 = vmatprep.subr.mxu0 0.0
    %493 = vmatpush1.msra.mxu0 %v377
    %494 = vmatprep.subr.mxu0 0.0
    %495 = vmatpush1.msra.mxu0 %v378
    %496 = vmatprep.subr.mxu0 0.0
    %497 = vmatpush1.msra.mxu0 %v379
    %498 = vmatprep.subr.mxu0 0.0
    %499 = vmatpush1.msra.mxu0 %v380
    %500 = vmatprep.subr.mxu0 0.0
    %501 = vmatpush1.msra.mxu0 %v381
    %502 = vmatprep.subr.mxu0 0.0
    %503 = vmatpush1.msra.mxu0 %v382
    %504 = vmatprep.subr.mxu0 0.0
    %505 = vmatpush1.msra.mxu0 %v383
    %506 = vmatprep.subr.mxu0 0.0
    %507 = vmatpush1.msra.mxu0 %v384
    %508 = vmatprep.subr.mxu0 0.0
    %509 = vmatpush1.msra.mxu0 %v385
    %510 = vmatprep.subr.mxu0 0.0
    %511 = vmatpush1.msra.mxu0 %v386
    %512 = vmatprep.subr.mxu0 0.0
    %513 = vmatpush1.msra.mxu0 %v387
    %514 = vmatprep.subr.mxu0 0.0
    %515 = vmatpush1.msra.mxu0 %v388
    %516 = vmatprep.subr.mxu0 0.0
    %517 = vmatpush1.msra.mxu0 %v389
    %518 = vmatprep.subr.mxu0 0.0
    %519 = vmatpush1.msra.mxu0 %v390
    %520 = vmatprep.subr.mxu0 0.0
    %521 = vmatpush1.msra.mxu0 %v391
    %522 = vmatprep.subr.mxu0 0.0
    %523 = vmatpush1.msra.mxu0 %v392
    %524 = vmatprep.subr.mxu0 0.0
    %525 = vmatpush1.msra.mxu0 %v393
    %526 = vmatprep.subr.mxu0 0.0
    %527 = vmatpush1.msra.mxu0 %v394
    %528 = vmatprep.subr.mxu0 0.0
    %529 = vmatpush1.msra.mxu0 %v395
    %530 = vmatprep.subr.mxu0 0.0
    %531 = vmatpush1.msra.mxu0 %v396
    %532 = vmatprep.subr.mxu0 0.0
    %533 = vmatpush1.msra.mxu0 %v397
    %534 = vmatprep.subr.mxu0 0.0
    %535 = vmatpush1.msra.mxu0 %v398
    %536 = vmatprep.subr.mxu0 0.0
    %537 = vmatpush1.msra.mxu0 %v399
    %538 = vmatprep.subr.mxu0 0.0
    %539 = vmatpush1.msra.mxu0 %v400
    %540 = vmatprep.subr.mxu0 0.0
    %541 = vmatpush1.msra.mxu0 %v401
    %542 = vmatprep.subr.mxu0 0.0
    %543 = vmatpush1.msra.mxu0 %v402
    %544 = vmatprep.subr.mxu0 0.0
    %545 = vmatpush1.msra.mxu0 %v403
    %546 = vmatprep.subr.mxu0 0.0
    %547 = vmatpush1.msra.mxu0 %v404
    %548 = vmatprep.subr.mxu0 0.0
    %549 = vmatpush1.msra.mxu0 %v405
    %550 = vmatprep.subr.mxu0 0.0
    %551 = vmatpush1.msra.mxu0 %v406
    %552 = vmatprep.subr.mxu0 0.0
    %553 = vmatpush1.msra.mxu0 %v407
    %554 = vmatprep.mubr.f32.mxu0 %v339
    %555 = vmatmul.mubr.f32.gmra.mrb[0].mxu0 %v338
    %v556 = vpop.f32.mrb[0].mxu0
    %v557 = vadd.f32 %v482, %v556
    %v558 = vpop.f32.mrb[0].mxu0
    %559 = vmatprep.mubr.f32.mxu0 %v343
    %560 = vmatmul.mubr.f32.gmra.mrb[0].mxu0 %v342
    %v561 = vpop.f32.mrb[0].mxu0
    %v562 = vadd.f32 %v487, %v561
    %v563 = vpop.f32.mrb[0].mxu0
    %564 = vdwg.mxu0
    %565 = vst [vmem:[#allocation8] sm:$0xff] %v557
    %566 = vst [vmem:[#allocation8 + $0x8] sm:$0xff] %v562
    // Predicated region
    $region34: #{tpu_custom_call.1} parent=1 // pred_check
      _
    $region35: #{tpu_custom_call.1} parent=1 // pred_check_branch
      %568 = sbr.rel (0) target = $region37
    $region36: #{tpu_custom_call.1} parent=1 // pred_region
      %s570 = ssub.s32 256, 256
      %571 = vsyncadd [#allocation4], %s570
      %s572 = sshll.u32 [#allocation8], 4
      %s573 = int_to_ptr.vmem [resolvable:$true] %s572
      %578 = dma.vmem_to_hbm [thread:$0]  %s573, 256, %s5, [#allocation4], 128, 128, 8
    $region37: #{tpu_custom_call.1} parent=1 // pred_fallthru
      _
    // Predicated region
    $region38: #{tpu_custom_call.1} parent=1 // pred_check
      _
    $region39: #{tpu_custom_call.1} parent=1 // pred_check_branch
      %580 = sbr.rel (0) target = $region41
    $region40: #{tpu_custom_call.1} parent=1 // pred_region
      %581 = dma.done [#allocation4], 256
    $region41: #{tpu_custom_call.1} parent=1 // pred_fallthru
      _
    %582 = vsyncpa [#allocation3], 1
    %583 = vsyncpa [#allocation6], 1
    %584 = vsyncpa [#allocation4], 1

</llo_original>
